<compile_context>
chip_gen: v6e
topology: v6e:2x2x1
jax: 0.10.0
libtpu: 0.0.40
codegen_flags: <defaults>
</compile_context>

<pallas_src>
import functools

import jax
import jax.numpy as jnp
from jax.experimental import pallas as pl
from jax.experimental.pallas import tpu as pltpu

LN_EPS = 1e-5  # torch.nn.LayerNorm default


# -----------------------------------------------------------------------------
# Fused kernel
# -----------------------------------------------------------------------------
def _fused_transconv_kernel(x_ref, fc_w_ref, w_qkv_ref, vec_ref, o_ref, *,
                            hidden, num_heads, seg, n_nodes):
    f32 = jnp.float32
    hd = hidden * num_heads
    n_f = float(n_nodes)

    # ---- unpack the packed (8, seg) parameter-vector slab (single DMA) --------
    fc_b  = vec_ref[0:1, 0:hidden]
    ln0_g = vec_ref[1:2, 0:hidden]
    ln0_b = vec_ref[2:3, 0:hidden]
    ln1_g = vec_ref[3:4, 0:hidden]
    ln1_b = vec_ref[4:5, 0:hidden]
    bq    = vec_ref[5:6, :]
    bk    = vec_ref[6:7, :]
    bv    = vec_ref[7:8, :]

    # ---- fc0 -> LayerNorm -> ReLU ----------------------------------------------
    x = x_ref[...]                                                      # [N, Cin]
    h = jnp.dot(x, fc_w_ref[...], preferred_element_type=f32) + fc_b
    mu = jnp.mean(h, axis=-1, keepdims=True)
    var = jnp.mean((h - mu) ** 2, axis=-1, keepdims=True)
    h = (h - mu) * jax.lax.rsqrt(var + LN_EPS) * ln0_g + ln0_b
    h = jnp.maximum(h, 0.0)                                             # [N, H]
    # dropout: identity (eval mode)

    # ---- fused, lane-aligned QKV projection (one matmul) ------------------------
    qkv = jnp.dot(h, w_qkv_ref[...], preferred_element_type=f32)        # [N, 3*seg]
    qs = qkv[:, 0:seg] + bq              # cols >= hd stay exactly zero
    ks = qkv[:, seg:2 * seg] + bk
    vs = qkv[:, 2 * seg:3 * seg] + bv

    # global (Frobenius) L2 norms over the full qs / ks tensors (torch.norm p=2);
    # zero padding contributes nothing to the sums.
    qs = qs * jax.lax.rsqrt(jnp.sum(qs * qs))
    ks = ks * jax.lax.rsqrt(jnp.sum(ks * ks))

    # ---- head-mask / head-mean constants built in-kernel (VPU iota + compares,
    #      no HBM DMAs; no integer div/mod — static per-head ranges) -------------
    row = jax.lax.broadcasted_iota(jnp.int32, (seg, seg), 0)
    col = jax.lax.broadcasted_iota(jnp.int32, (seg, seg), 1)
    mrow = jax.lax.broadcasted_iota(jnp.int32, (seg, hidden), 0)
    mcol = jax.lax.broadcasted_iota(jnp.int32, (seg, hidden), 1)
    mask_bool = None
    mean_bool = None
    for h_idx in range(num_heads):
        lo = h_idx * hidden
        hi = lo + hidden
        blk = (row >= lo) & (row < hi) & (col >= lo) & (col < hi)
        mb = (mrow - lo) == mcol   # one-hot (i % hidden) only for rows in head h_idx
        mask_bool = blk if mask_bool is None else (mask_bool | blk)
        mean_bool = mb if mean_bool is None else (mean_bool | mb)
    head_mask = mask_bool.astype(f32)                                   # [seg, seg]
    mean_mat = mean_bool.astype(f32) * (1.0 / num_heads)                # [seg, H]

    # ---- linear attention: all heads via block-diag mask; one K^T V matmul -----
    full_kv = jax.lax.dot_general(ks, vs, (((0,), (0,)), ((), ())),
                                  preferred_element_type=f32)           # [seg, seg]
    att_num = jnp.dot(qs, full_kv * head_mask,
                      preferred_element_type=f32) + n_f * vs            # [N, seg]
    k_sum = jnp.sum(ks, axis=0, keepdims=True)                          # [1, seg]
    att_den = jnp.dot(qs * k_sum, head_mask,
                      preferred_element_type=f32) + n_f                 # [N, seg]
    # mean over heads via the head-mean matrix (padded cols are exactly zero and
    # mean_mat rows >= hd are zero, so padding never leaks into the result)
    out = jnp.dot(att_num / att_den, mean_mat,
                  preferred_element_type=f32)                           # [N, H]

    # ---- residual + LayerNorm + ReLU -------------------------------------------
    out = (out + h) * 0.5
    mu = jnp.mean(out, axis=-1, keepdims=True)
    var = jnp.mean((out - mu) ** 2, axis=-1, keepdims=True)
    out = (out - mu) * jax.lax.rsqrt(var + LN_EPS) * ln1_g + ln1_b
    o_ref[...] = jnp.maximum(out, 0.0).astype(o_ref.dtype)
    # dropout: identity (eval mode)


def transconv_forward(x, params, *, num_heads):
    n, _ = x.shape
    hidden = params["fc_w"].shape[1]
    hd = hidden * num_heads
    seg = pl.cdiv(hd, 128) * 128   # lane-tile-aligned width per q/k/v segment
    f32 = jnp.float32

    # lane-aligned fused QKV weight: wq at [:, :hd], wk at [:, seg:seg+hd], wv at
    # [:, 2*seg:2*seg+hd]; padded columns are zero (inert through the kernel math).
    w_qkv = jnp.zeros((hidden, 3 * seg), f32)
    w_qkv = w_qkv.at[:, 0:hd].set(params["wq"])
    w_qkv = w_qkv.at[:, seg:seg + hd].set(params["wk"])
    w_qkv = w_qkv.at[:, 2 * seg:2 * seg + hd].set(params["wv"])

    # pack every per-channel vector into ONE (8, seg) slab -> single DMA descriptor
    def _row(v):
        v = v.astype(f32)
        return jnp.pad(v, (0, seg - v.shape[0]))
    vec_slab = jnp.stack([
        _row(params["fc_b"]), _row(params["ln0_g"]), _row(params["ln0_b"]),
        _row(params["ln1_g"]), _row(params["ln1_b"]),
        _row(params["bq"]), _row(params["bk"]), _row(params["bv"]),
    ])

    vmem = pl.BlockSpec(memory_space=pltpu.MemorySpace.VMEM)
    kern = functools.partial(_fused_transconv_kernel, hidden=hidden,
                             num_heads=num_heads, seg=seg, n_nodes=n)
    return pl.pallas_call(
        kern,
        out_shape=jax.ShapeDtypeStruct((n, hidden), f32),
        in_specs=[vmem] * 4,
        out_specs=vmem,
    )(x, params["fc_w"], w_qkv, vec_slab)


# -----------------------------------------------------------------------------
# Pure-JAX reference (mirrors the PyTorch forward) for correctness checking
# -----------------------------------------------------------------------------
def _layernorm(x, g, b):
    mu = jnp.mean(x, axis=-1, keepdims=True)
    var = jnp.mean((x - mu) ** 2, axis=-1, keepdims=True)
    return (x - mu) * jax.lax.rsqrt(var + LN_EPS) * g + b


def reference_forward(x, params, *, num_heads):
    h = x @ params["fc_w"] + params["fc_b"]
    h = _layernorm(h, params["ln0_g"], params["ln0_b"])
    h = jnp.maximum(h, 0.0)

    n, _ = h.shape
    d = params["wq"].shape[1] // num_heads
    qs = (h @ params["wq"] + params["bq"]).reshape(n, num_heads, d)
    ks = (h @ params["wk"] + params["bk"]).reshape(n, num_heads, d)
    vs = (h @ params["wv"] + params["bv"]).reshape(n, num_heads, d)
    qs = qs / jnp.linalg.norm(qs)
    ks = ks / jnp.linalg.norm(ks)
    kvs = jnp.einsum('lhm,lhd->hmd', ks, vs)
    att_num = jnp.einsum('nhm,hmd->nhd', qs, kvs) + n * vs
    ks_sum = jnp.sum(ks, axis=0)
    att_den = jnp.einsum('nhm,hm->nh', qs, ks_sum)[..., None] + n
    out = (att_num / att_den).mean(axis=1)

    out = (out + h) / 2.0
    out = _layernorm(out, params["ln1_g"], params["ln1_b"])
    return jnp.maximum(out, 0.0)


# -----------------------------------------------------------------------------
# Deterministic parameter init + run
# -----------------------------------------------------------------------------
def init_params(key, in_channels, hidden, num_heads):
    ks = jax.random.split(key, 10)

    def lin(k, fan_in, fan_out):
        scale = 1.0 / jnp.sqrt(jnp.float32(fan_in))
        kw, kb = jax.random.split(k)
        w = jax.random.uniform(kw, (fan_in, fan_out), jnp.float32, -scale, scale)
        b = jax.random.uniform(kb, (fan_out,), jnp.float32, -scale, scale)
        return w, b

    fc_w, fc_b = lin(ks[0], in_channels, hidden)
    wq, bq = lin(ks[1], hidden, hidden * num_heads)
    wk, bk = lin(ks[2], hidden, hidden * num_heads)
    wv, bv = lin(ks[3], hidden, hidden * num_heads)
    ln0_g = 1.0 + 0.1 * jax.random.normal(ks[4], (hidden,), jnp.float32)
    ln0_b = 0.1 * jax.random.normal(ks[5], (hidden,), jnp.float32)
    ln1_g = 1.0 + 0.1 * jax.random.normal(ks[6], (hidden,), jnp.float32)
    ln1_b = 0.1 * jax.random.normal(ks[7], (hidden,), jnp.float32)
    return dict(fc_w=fc_w, fc_b=fc_b, wq=wq, bq=bq, wk=wk, bk=bk, wv=wv, bv=bv,
                ln0_g=ln0_g, ln0_b=ln0_b, ln1_g=ln1_g, ln1_b=ln1_b)


if __name__ == "__main__":
    N = 64            # number of nodes / tokens
    IN_CH = 16        # in_channels
    HIDDEN = 32       # hidden_channels (= out_channels of each head)
    NUM_HEADS = 2

    key = jax.random.PRNGKey(0)
    kx, kp = jax.random.split(key)
    x = jax.random.normal(kx, (N, IN_CH), jnp.float32)
    params = init_params(kp, IN_CH, HIDDEN, NUM_HEADS)

    out = jax.block_until_ready(transconv_forward(x, params, num_heads=NUM_HEADS))
    ref = jax.block_until_ready(reference_forward(x, params, num_heads=NUM_HEADS))

    assert out.shape == (N, HIDDEN)
    err = jnp.max(jnp.abs(out - ref))
    assert jnp.allclose(out, ref, atol=1e-4, rtol=1e-4), f"max abs err {err}"

    print("KERNEL_OK")
</pallas_src>

<mosaic_0001>
module attributes {stable_mosaic.version = 11 : i64} {
  func.func @_fused_transconv_kernel(%arg0: memref<64x16xf32, #tpu.memory_space<vmem>>, %arg1: memref<16x32xf32, #tpu.memory_space<vmem>>, %arg2: memref<32x384xf32, #tpu.memory_space<vmem>>, %arg3: memref<8x128xf32, #tpu.memory_space<vmem>>, %arg4: memref<64x32xf32, #tpu.memory_space<vmem>>) attributes {dimension_semantics = [], scalar_prefetch = 0 : i64, scratch_operands = 0 : i64, tpu.core_type = #tpu.core_type<tc>} {
    %c0 = arith.constant 0 : index
    %c0_0 = arith.constant 0 : index
    %0 = vector.load %arg3[%c0, %c0_0] : memref<8x128xf32, #tpu.memory_space<vmem>>, vector<1x32xf32>
    %c1 = arith.constant 1 : index
    %c0_1 = arith.constant 0 : index
    %1 = vector.load %arg3[%c1, %c0_1] : memref<8x128xf32, #tpu.memory_space<vmem>>, vector<1x32xf32>
    %c2 = arith.constant 2 : index
    %c0_2 = arith.constant 0 : index
    %2 = vector.load %arg3[%c2, %c0_2] : memref<8x128xf32, #tpu.memory_space<vmem>>, vector<1x32xf32>
    %c3 = arith.constant 3 : index
    %c0_3 = arith.constant 0 : index
    %3 = vector.load %arg3[%c3, %c0_3] : memref<8x128xf32, #tpu.memory_space<vmem>>, vector<1x32xf32>
    %c4 = arith.constant 4 : index
    %c0_4 = arith.constant 0 : index
    %4 = vector.load %arg3[%c4, %c0_4] : memref<8x128xf32, #tpu.memory_space<vmem>>, vector<1x32xf32>
    %c5 = arith.constant 5 : index
    %c0_5 = arith.constant 0 : index
    %5 = vector.load %arg3[%c5, %c0_5] : memref<8x128xf32, #tpu.memory_space<vmem>>, vector<1x128xf32>
    %c6 = arith.constant 6 : index
    %c0_6 = arith.constant 0 : index
    %6 = vector.load %arg3[%c6, %c0_6] : memref<8x128xf32, #tpu.memory_space<vmem>>, vector<1x128xf32>
    %c7 = arith.constant 7 : index
    %c0_7 = arith.constant 0 : index
    %7 = vector.load %arg3[%c7, %c0_7] : memref<8x128xf32, #tpu.memory_space<vmem>>, vector<1x128xf32>
    %c0_8 = arith.constant 0 : index
    %c0_9 = arith.constant 0 : index
    %8 = vector.load %arg0[%c0_8, %c0_9] : memref<64x16xf32, #tpu.memory_space<vmem>>, vector<64x16xf32>
    %c0_10 = arith.constant 0 : index
    %c0_11 = arith.constant 0 : index
    %9 = vector.load %arg1[%c0_10, %c0_11] : memref<16x32xf32, #tpu.memory_space<vmem>>, vector<16x32xf32>
    %cst = arith.constant dense<0.000000e+00> : vector<64x32xf32>
    %10 = tpu.matmul %8, %9, %cst {dimension_numbers = #tpu.dot_dimension_numbers<[1], [0], [0], [1], [0, 0, 1, 1], [], []>} : vector<64x16xf32>, vector<16x32xf32>, vector<64x32xf32> -> vector<64x32xf32>
    %11 = vector.broadcast %0 : vector<1x32xf32> to vector<64x32xf32>
    %12 = arith.addf %10, %11 : vector<64x32xf32>
    %cst_12 = arith.constant dense<0.000000e+00> : vector<64xf32>
    %13 = vector.multi_reduction <add>, %12, %cst_12 [1] : vector<64x32xf32> to vector<64xf32>
    %14 = vector.shape_cast %13 : vector<64xf32> to vector<64x1xf32>
    %cst_13 = arith.constant 3.200000e+01 : f32
    %15 = vector.broadcast %cst_13 : f32 to vector<64x1xf32>
    %16 = arith.divf %14, %15 : vector<64x1xf32>
    %17 = vector.broadcast %16 : vector<64x1xf32> to vector<64x32xf32>
    %18 = arith.subf %12, %17 : vector<64x32xf32>
    %19 = arith.mulf %18, %18 : vector<64x32xf32>
    %cst_14 = arith.constant dense<0.000000e+00> : vector<64xf32>
    %20 = vector.multi_reduction <add>, %19, %cst_14 [1] : vector<64x32xf32> to vector<64xf32>
    %21 = vector.shape_cast %20 : vector<64xf32> to vector<64x1xf32>
    %cst_15 = arith.constant 3.200000e+01 : f32
    %22 = vector.broadcast %cst_15 : f32 to vector<64x1xf32>
    %23 = arith.divf %21, %22 : vector<64x1xf32>
    %24 = vector.broadcast %16 : vector<64x1xf32> to vector<64x32xf32>
    %25 = arith.subf %12, %24 : vector<64x32xf32>
    %cst_16 = arith.constant 9.99999974E-6 : f32
    %26 = vector.broadcast %cst_16 : f32 to vector<64x1xf32>
    %27 = arith.addf %23, %26 : vector<64x1xf32>
    %28 = math.rsqrt %27 : vector<64x1xf32>
    %29 = vector.broadcast %28 : vector<64x1xf32> to vector<64x32xf32>
    %30 = arith.mulf %25, %29 : vector<64x32xf32>
    %31 = vector.broadcast %1 : vector<1x32xf32> to vector<64x32xf32>
    %32 = arith.mulf %30, %31 : vector<64x32xf32>
    %33 = vector.broadcast %2 : vector<1x32xf32> to vector<64x32xf32>
    %34 = arith.addf %32, %33 : vector<64x32xf32>
    %cst_17 = arith.constant 0.000000e+00 : f32
    %35 = vector.broadcast %cst_17 : f32 to vector<64x32xf32>
    %36 = arith.maximumf %34, %35 : vector<64x32xf32>
    %c0_18 = arith.constant 0 : index
    %c0_19 = arith.constant 0 : index
    %37 = vector.load %arg2[%c0_18, %c0_19] : memref<32x384xf32, #tpu.memory_space<vmem>>, vector<32x384xf32>
    %cst_20 = arith.constant dense<0.000000e+00> : vector<64x384xf32>
    %38 = tpu.matmul %36, %37, %cst_20 {dimension_numbers = #tpu.dot_dimension_numbers<[1], [0], [0], [1], [0, 0, 1, 1], [], []>} : vector<64x32xf32>, vector<32x384xf32>, vector<64x384xf32> -> vector<64x384xf32>
    %39 = vector.extract_strided_slice %38 {offsets = [0, 0], sizes = [64, 128], strides = [1, 1]} : vector<64x384xf32> to vector<64x128xf32>
    %40 = vector.broadcast %5 : vector<1x128xf32> to vector<64x128xf32>
    %41 = arith.addf %39, %40 : vector<64x128xf32>
    %42 = vector.extract_strided_slice %38 {offsets = [0, 128], sizes = [64, 128], strides = [1, 1]} : vector<64x384xf32> to vector<64x128xf32>
    %43 = vector.broadcast %6 : vector<1x128xf32> to vector<64x128xf32>
    %44 = arith.addf %42, %43 : vector<64x128xf32>
    %45 = vector.extract_strided_slice %38 {offsets = [0, 256], sizes = [64, 128], strides = [1, 1]} : vector<64x384xf32> to vector<64x128xf32>
    %46 = vector.broadcast %7 : vector<1x128xf32> to vector<64x128xf32>
    %47 = arith.addf %45, %46 : vector<64x128xf32>
    %48 = arith.mulf %41, %41 : vector<64x128xf32>
    %49 = vector.shape_cast %48 : vector<64x128xf32> to vector<1x64x128xf32>
    %cst_21 = arith.constant dense<0.000000e+00> : vector<1xf32>
    %50 = vector.multi_reduction <add>, %49, %cst_21 [1, 2] : vector<1x64x128xf32> to vector<1xf32>
    %51 = vector.shape_cast %50 : vector<1xf32> to vector<1x1x1xf32>
    %52 = vector.extract %51[0, 0, 0] : f32 from vector<1x1x1xf32>
    %53 = math.rsqrt %52 : f32
    %54 = vector.broadcast %53 : f32 to vector<64x128xf32>
    %55 = arith.mulf %41, %54 : vector<64x128xf32>
    %56 = arith.mulf %44, %44 : vector<64x128xf32>
    %57 = vector.shape_cast %56 : vector<64x128xf32> to vector<1x64x128xf32>
    %cst_22 = arith.constant dense<0.000000e+00> : vector<1xf32>
    %58 = vector.multi_reduction <add>, %57, %cst_22 [1, 2] : vector<1x64x128xf32> to vector<1xf32>
    %59 = vector.shape_cast %58 : vector<1xf32> to vector<1x1x1xf32>
    %60 = vector.extract %59[0, 0, 0] : f32 from vector<1x1x1xf32>
    %61 = math.rsqrt %60 : f32
    %62 = vector.broadcast %61 : f32 to vector<64x128xf32>
    %63 = arith.mulf %44, %62 : vector<64x128xf32>
    %64 = tpu.iota {dimensions = array<i32: 0>} : vector<128x128xi32>
    %65 = tpu.iota {dimensions = array<i32: 1>} : vector<128x128xi32>
    %66 = tpu.iota {dimensions = array<i32: 0>} : vector<128x32xi32>
    %67 = tpu.iota {dimensions = array<i32: 1>} : vector<128x32xi32>
    %c0_i32 = arith.constant 0 : i32
    %68 = vector.broadcast %c0_i32 : i32 to vector<128x128xi32>
    %69 = arith.cmpi sge, %64, %68 : vector<128x128xi32>
    %c32_i32 = arith.constant 32 : i32
    %70 = vector.broadcast %c32_i32 : i32 to vector<128x128xi32>
    %71 = arith.cmpi slt, %64, %70 : vector<128x128xi32>
    %72 = arith.andi %69, %71 : vector<128x128xi1>
    %c0_i32_23 = arith.constant 0 : i32
    %73 = vector.broadcast %c0_i32_23 : i32 to vector<128x128xi32>
    %74 = arith.cmpi sge, %65, %73 : vector<128x128xi32>
    %75 = arith.andi %72, %74 : vector<128x128xi1>
    %c32_i32_24 = arith.constant 32 : i32
    %76 = vector.broadcast %c32_i32_24 : i32 to vector<128x128xi32>
    %77 = arith.cmpi slt, %65, %76 : vector<128x128xi32>
    %78 = arith.andi %75, %77 : vector<128x128xi1>
    %c0_i32_25 = arith.constant 0 : i32
    %79 = vector.broadcast %c0_i32_25 : i32 to vector<128x32xi32>
    %80 = arith.subi %66, %79 : vector<128x32xi32>
    %81 = arith.cmpi eq, %80, %67 : vector<128x32xi32>
    %c32_i32_26 = arith.constant 32 : i32
    %82 = vector.broadcast %c32_i32_26 : i32 to vector<128x128xi32>
    %83 = arith.cmpi sge, %64, %82 : vector<128x128xi32>
    %c64_i32 = arith.constant 64 : i32
    %84 = vector.broadcast %c64_i32 : i32 to vector<128x128xi32>
    %85 = arith.cmpi slt, %64, %84 : vector<128x128xi32>
    %86 = arith.andi %83, %85 : vector<128x128xi1>
    %c32_i32_27 = arith.constant 32 : i32
    %87 = vector.broadcast %c32_i32_27 : i32 to vector<128x128xi32>
    %88 = arith.cmpi sge, %65, %87 : vector<128x128xi32>
    %89 = arith.andi %86, %88 : vector<128x128xi1>
    %c64_i32_28 = arith.constant 64 : i32
    %90 = vector.broadcast %c64_i32_28 : i32 to vector<128x128xi32>
    %91 = arith.cmpi slt, %65, %90 : vector<128x128xi32>
    %92 = arith.andi %89, %91 : vector<128x128xi1>
    %c32_i32_29 = arith.constant 32 : i32
    %93 = vector.broadcast %c32_i32_29 : i32 to vector<128x32xi32>
    %94 = arith.subi %66, %93 : vector<128x32xi32>
    %95 = arith.cmpi eq, %94, %67 : vector<128x32xi32>
    %96 = arith.ori %78, %92 : vector<128x128xi1>
    %97 = arith.ori %81, %95 : vector<128x32xi1>
    %98 = arith.extui %96 : vector<128x128xi1> to vector<128x128xi32>
    %99 = arith.sitofp %98 : vector<128x128xi32> to vector<128x128xf32>
    %100 = arith.extui %97 : vector<128x32xi1> to vector<128x32xi32>
    %101 = arith.sitofp %100 : vector<128x32xi32> to vector<128x32xf32>
    %cst_30 = arith.constant 5.000000e-01 : f32
    %102 = vector.broadcast %cst_30 : f32 to vector<128x32xf32>
    %103 = arith.mulf %101, %102 : vector<128x32xf32>
    %cst_31 = arith.constant dense<0.000000e+00> : vector<128x128xf32>
    %104 = tpu.matmul %63, %47, %cst_31 {dimension_numbers = #tpu.dot_dimension_numbers<[0], [0], [1], [1], [0, 1, 1, 1], [], []>} : vector<64x128xf32>, vector<64x128xf32>, vector<128x128xf32> -> vector<128x128xf32>
    %105 = arith.mulf %104, %99 : vector<128x128xf32>
    %cst_32 = arith.constant dense<0.000000e+00> : vector<64x128xf32>
    %106 = tpu.matmul %55, %105, %cst_32 {dimension_numbers = #tpu.dot_dimension_numbers<[1], [0], [0], [1], [0, 0, 1, 1], [], []>} : vector<64x128xf32>, vector<128x128xf32>, vector<64x128xf32> -> vector<64x128xf32>
    %cst_33 = arith.constant 6.400000e+01 : f32
    %107 = vector.broadcast %cst_33 : f32 to vector<64x128xf32>
    %108 = arith.mulf %107, %47 : vector<64x128xf32>
    %109 = arith.addf %106, %108 : vector<64x128xf32>
    %cst_34 = arith.constant dense<0.000000e+00> : vector<128xf32>
    %110 = vector.multi_reduction <add>, %63, %cst_34 [0] : vector<64x128xf32> to vector<128xf32>
    %111 = vector.shape_cast %110 : vector<128xf32> to vector<1x128xf32>
    %112 = vector.broadcast %111 : vector<1x128xf32> to vector<64x128xf32>
    %113 = arith.mulf %55, %112 : vector<64x128xf32>
    %cst_35 = arith.constant dense<0.000000e+00> : vector<64x128xf32>
    %114 = tpu.matmul %113, %99, %cst_35 {dimension_numbers = #tpu.dot_dimension_numbers<[1], [0], [0], [1], [0, 0, 1, 1], [], []>} : vector<64x128xf32>, vector<128x128xf32>, vector<64x128xf32> -> vector<64x128xf32>
    %cst_36 = arith.constant 6.400000e+01 : f32
    %115 = vector.broadcast %cst_36 : f32 to vector<64x128xf32>
    %116 = arith.addf %114, %115 : vector<64x128xf32>
    %117 = arith.divf %109, %116 : vector<64x128xf32>
    %cst_37 = arith.constant dense<0.000000e+00> : vector<64x32xf32>
    %118 = tpu.matmul %117, %103, %cst_37 {dimension_numbers = #tpu.dot_dimension_numbers<[1], [0], [0], [1], [0, 0, 1, 1], [], []>} : vector<64x128xf32>, vector<128x32xf32>, vector<64x32xf32> -> vector<64x32xf32>
    %119 = arith.addf %118, %36 : vector<64x32xf32>
    %cst_38 = arith.constant 5.000000e-01 : f32
    %120 = vector.broadcast %cst_38 : f32 to vector<64x32xf32>
    %121 = arith.mulf %119, %120 : vector<64x32xf32>
    %cst_39 = arith.constant dense<0.000000e+00> : vector<64xf32>
    %122 = vector.multi_reduction <add>, %121, %cst_39 [1] : vector<64x32xf32> to vector<64xf32>
    %123 = vector.shape_cast %122 : vector<64xf32> to vector<64x1xf32>
    %cst_40 = arith.constant 3.200000e+01 : f32
    %124 = vector.broadcast %cst_40 : f32 to vector<64x1xf32>
    %125 = arith.divf %123, %124 : vector<64x1xf32>
    %126 = vector.broadcast %125 : vector<64x1xf32> to vector<64x32xf32>
    %127 = arith.subf %121, %126 : vector<64x32xf32>
    %128 = arith.mulf %127, %127 : vector<64x32xf32>
    %cst_41 = arith.constant dense<0.000000e+00> : vector<64xf32>
    %129 = vector.multi_reduction <add>, %128, %cst_41 [1] : vector<64x32xf32> to vector<64xf32>
    %130 = vector.shape_cast %129 : vector<64xf32> to vector<64x1xf32>
    %cst_42 = arith.constant 3.200000e+01 : f32
    %131 = vector.broadcast %cst_42 : f32 to vector<64x1xf32>
    %132 = arith.divf %130, %131 : vector<64x1xf32>
    %133 = vector.broadcast %125 : vector<64x1xf32> to vector<64x32xf32>
    %134 = arith.subf %121, %133 : vector<64x32xf32>
    %cst_43 = arith.constant 9.99999974E-6 : f32
    %135 = vector.broadcast %cst_43 : f32 to vector<64x1xf32>
    %136 = arith.addf %132, %135 : vector<64x1xf32>
    %137 = math.rsqrt %136 : vector<64x1xf32>
    %138 = vector.broadcast %137 : vector<64x1xf32> to vector<64x32xf32>
    %139 = arith.mulf %134, %138 : vector<64x32xf32>
    %140 = vector.broadcast %3 : vector<1x32xf32> to vector<64x32xf32>
    %141 = arith.mulf %139, %140 : vector<64x32xf32>
    %142 = vector.broadcast %4 : vector<1x32xf32> to vector<64x32xf32>
    %143 = arith.addf %141, %142 : vector<64x32xf32>
    %cst_44 = arith.constant 0.000000e+00 : f32
    %144 = vector.broadcast %cst_44 : f32 to vector<64x32xf32>
    %145 = arith.maximumf %143, %144 : vector<64x32xf32>
    %c0_45 = arith.constant 0 : index
    %c0_46 = arith.constant 0 : index
    %146 = vector.load %arg4[%c0_45, %c0_46] : memref<64x32xf32, #tpu.memory_space<vmem>>, vector<64x32xf32>
    tpu.vector_store %arg4[%c0_45, %c0_46], %145 {strides = array<i32>} : memref<64x32xf32, #tpu.memory_space<vmem>>, vector<64x32xf32>,
    return
  }
}

</mosaic_0001>

<llo_original>
// kernel: tpu_custom_call.1
$region0: #{tpu_custom_call.1}
  #allocation0 [shape = 'u32[]', space=smem, size = 0x4, offset = 0x4, fixed_abs, tag = 'smem constant byte address 0x4 - core index']
  #allocation1 [shape = 'u32[144,128]{1,0:T(1,128)}', space=vmem, size = 0x12000, scoped, tag = 'internal scratch']
  %s0 = inlined_call_operand.vmem [shape: f32[64,16], index: 0, kind: input, shape index: {}]
  %s1 = inlined_call_operand.vmem [shape: f32[16,32], index: 1, kind: input, shape index: {}]
  %s2 = inlined_call_operand.hbm [shape: f32[32,384], index: 2, kind: input, shape index: {}]
  %s3 = inlined_call_operand.vmem [shape: f32[8,128], index: 3, kind: input, shape index: {}]
  %s4 = inlined_call_operand.vmem [shape: f32[64,32], index: 4, kind: output, shape index: {}]
  %s5 = sld [smem:[#allocation0]]
  $region30: #{tpu_custom_call.1} parent=0
    _
  %s7 = ssub.s32 1, %s5
  %s8 = scalar_select 0, %s7, %s5
  $region1: #{tpu_custom_call.1} parent=0
    #allocation2 [shape = 'u8[49152]{0}', space=vmem, size = 0xc000, scoped, tag = 'input window, operand 2, single buffered']
    #allocation3 [shape = 's32[1]{0}', space=sflag, size = 0x4, scoped, tag = 'scoped memory for tpu_custom_call.1']
    %9 = vsyncpa [#allocation3], 0
    // Predicated region
    $region2: #{tpu_custom_call.1} parent=1 // pred_check
      _
    $region3: #{tpu_custom_call.1} parent=1 // pred_check_branch
      %11 = sbr.rel (0) target = $region5
    $region4: #{tpu_custom_call.1} parent=1 // pred_region
      _
    $region5: #{tpu_custom_call.1} parent=1 // pred_fallthru
      _
    // Predicated region
    $region6: #{tpu_custom_call.1} parent=1 // pred_check
      _
    $region7: #{tpu_custom_call.1} parent=1 // pred_check_branch
      %13 = sbr.rel (0) target = $region9
    $region8: #{tpu_custom_call.1} parent=1 // pred_region
      _
    $region9: #{tpu_custom_call.1} parent=1 // pred_fallthru
      _
    // Predicated region
    $region10: #{tpu_custom_call.1} parent=1 // pred_check
      _
    $region11: #{tpu_custom_call.1} parent=1 // pred_check_branch
      %15 = sbr.rel (0) target = $region13
    $region12: #{tpu_custom_call.1} parent=1 // pred_region
      %s17 = ssub.s32 1536, 1536
      %18 = vsyncadd [#allocation3], %s17
      %s19 = sshll.u32 [#allocation2], 4
      %s20 = int_to_ptr.vmem [resolvable:$true] %s19
      %25 = dma.hbm_to_vmem [thread:$0]  %s2, 1536, %s20, [#allocation3], 384, 384, 24
    $region13: #{tpu_custom_call.1} parent=1 // pred_fallthru
      _
    // Predicated region
    $region14: #{tpu_custom_call.1} parent=1 // pred_check
      _
    $region15: #{tpu_custom_call.1} parent=1 // pred_check_branch
      %27 = sbr.rel (0) target = $region17
    $region16: #{tpu_custom_call.1} parent=1 // pred_region
      _
    $region17: #{tpu_custom_call.1} parent=1 // pred_fallthru
      _
    // Predicated region
    $region18: #{tpu_custom_call.1} parent=1 // pred_check
      _
    $region19: #{tpu_custom_call.1} parent=1 // pred_check_branch
      %29 = sbr.rel (0) target = $region21
    $region20: #{tpu_custom_call.1} parent=1 // pred_region
      %30 = dma.done [#allocation3], 1536
    $region21: #{tpu_custom_call.1} parent=1 // pred_fallthru
      _
    %v31 = vld [vmem:[%s3] sm:$0x1]
    %v32 = vld [vmem:[%s3 + $0x1] sm:$0x1]
    %v33 = vld [vmem:[%s3 + $0x2] sm:$0x1]
    %v34 = vld [vmem:[%s3 + $0x3] sm:$0x1]
    %v35 = vld [vmem:[%s3 + $0x4] sm:$0x1]
    %v36 = vld [vmem:[%s3 + $0x5] sm:$0x1]
    %v37 = vld [vmem:[%s3 + $0x6] sm:$0x1]
    %v38 = vld [vmem:[%s3 + $0x7] sm:$0x1]
    %v39 = vld [vmem:[%s0] sm:$0xff]
    %v40 = vld [vmem:[%s0 + $0x8] sm:$0xff]
    %v41 = vld [vmem:[%s0 + $0x10] sm:$0xff]
    %v42 = vld [vmem:[%s0 + $0x18] sm:$0xff]
    %v43 = vld [vmem:[%s0 + $0x20] sm:$0xff]
    %v44 = vld [vmem:[%s0 + $0x28] sm:$0xff]
    %v45 = vld [vmem:[%s0 + $0x30] sm:$0xff]
    %v46 = vld [vmem:[%s0 + $0x38] sm:$0xff]
    %v47 = vld [vmem:[%s1] sm:$0xff]
    %v48 = vld [vmem:[%s1 + $0x8] sm:$0xff]
    %v49 = vlaneseq
    %v50 = vshrl.u32 %v49, 7
    %v51 = vsub.s32 0, %v50
    %v52 = vrot.slane %v31, %v51
    %vm53 = vcmask 130048
    %v55 = vsel %vm53, %v39, 0
    %v58 = vsel %vm53, %v40, 0
    %v61 = vsel %vm53, %v41, 0
    %v64 = vsel %vm53, %v42, 0
    %v67 = vsel %vm53, %v43, 0
    %v70 = vsel %vm53, %v44, 0
    %v73 = vsel %vm53, %v45, 0
    %v76 = vsel %vm53, %v46, 0
    %78 = vmatprep.subr.mxu0 0.0
    %79 = vmatpush1.msra.mxu0 0.0
    %80 = vmatprep.subr.mxu0 0.0
    %81 = vmatpush1.msra.mxu0 0.0
    %82 = vmatprep.subr.mxu0 0.0
    %83 = vmatpush1.msra.mxu0 0.0
    %84 = vmatprep.subr.mxu0 0.0
    %85 = vmatpush1.msra.mxu0 0.0
    %86 = vmatprep.subr.mxu0 0.0
    %87 = vmatpush1.msra.mxu0 0.0
    %88 = vmatprep.subr.mxu0 0.0
    %89 = vmatpush1.msra.mxu0 0.0
    %90 = vmatprep.subr.mxu0 0.0
    %91 = vmatpush1.msra.mxu0 0.0
    %92 = vmatprep.subr.mxu0 0.0
    %93 = vmatpush1.msra.mxu0 0.0
    %94 = vmatprep.subr.mxu0 0.0
    %95 = vmatpush1.msra.mxu0 0.0
    %96 = vmatprep.subr.mxu0 0.0
    %97 = vmatpush1.msra.mxu0 0.0
    %98 = vmatprep.subr.mxu0 0.0
    %99 = vmatpush1.msra.mxu0 0.0
    %100 = vmatprep.subr.mxu0 0.0
    %101 = vmatpush1.msra.mxu0 0.0
    %102 = vmatprep.subr.mxu0 0.0
    %103 = vmatpush1.msra.mxu0 0.0
    %104 = vmatprep.subr.mxu0 0.0
    %105 = vmatpush1.msra.mxu0 0.0
    %106 = vmatprep.subr.mxu0 0.0
    %107 = vmatpush1.msra.mxu0 %v48
    %108 = vmatprep.subr.mxu0 0.0
    %109 = vmatpush1.msra.mxu0 %v47
    %110 = vmatprep.subr.mxu0 0.0
    %111 = vmatpush2.msra.mxu0 0.0
    %112 = vmatprep.subr.mxu0 0.0
    %113 = vmatpush2.msra.mxu0 0.0
    %114 = vmatprep.subr.mxu0 0.0
    %115 = vmatpush2.msra.mxu0 0.0
    %116 = vmatprep.subr.mxu0 0.0
    %117 = vmatpush2.msra.mxu0 0.0
    %118 = vmatprep.subr.mxu0 0.0
    %119 = vmatpush2.msra.mxu0 0.0
    %120 = vmatprep.subr.mxu0 0.0
    %121 = vmatpush2.msra.mxu0 0.0
    %122 = vmatprep.subr.mxu0 0.0
    %123 = vmatpush2.msra.mxu0 0.0
    %124 = vmatprep.subr.mxu0 0.0
    %125 = vmatpush2.msra.mxu0 0.0
    %126 = vmatprep.subr.mxu0 0.0
    %127 = vmatpush2.msra.mxu0 0.0
    %128 = vmatprep.subr.mxu0 0.0
    %129 = vmatpush2.msra.mxu0 0.0
    %130 = vmatprep.subr.mxu0 0.0
    %131 = vmatpush2.msra.mxu0 0.0
    %132 = vmatprep.subr.mxu0 0.0
    %133 = vmatpush2.msra.mxu0 0.0
    %134 = vmatprep.subr.mxu0 0.0
    %135 = vmatpush2.msra.mxu0 0.0
    %136 = vmatprep.subr.mxu0 0.0
    %137 = vmatpush2.msra.mxu0 0.0
    %138 = vmatprep.subr.mxu0 0.0
    %139 = vmatpush2.msra.mxu0 0.0
    %140 = vmatprep.subr.mxu0 0.0
    %141 = vmatpush2.msra.mxu0 0.0
    %142 = vmatprep.mubr.f32.mxu0 0.0
    %143 = vmatmul.mubr.f32.gmra.mxu0 %v55
    %v144 = vpop.f32.mrf.mxu0
    %v145 = vadd.f32 %v52, %v144
    %v146 = vpop.f32.mrf.mxu0
    %147 = vmatprep.mubr.f32.mxu0 0.0
    %148 = vmatmul.mubr.f32.gmra.mxu0 %v58
    %v149 = vpop.f32.mrf.mxu0
    %v150 = vadd.f32 %v52, %v149
    %v151 = vpop.f32.mrf.mxu0
    %152 = vmatprep.mubr.f32.mxu0 0.0
    %153 = vmatmul.mubr.f32.gmra.mxu0 %v61
    %v154 = vpop.f32.mrf.mxu0
    %v155 = vadd.f32 %v52, %v154
    %v156 = vpop.f32.mrf.mxu0
    %157 = vmatprep.mubr.f32.mxu0 0.0
    %158 = vmatmul.mubr.f32.gmra.mxu0 %v64
    %v159 = vpop.f32.mrf.mxu0
    %v160 = vadd.f32 %v52, %v159
    %v161 = vpop.f32.mrf.mxu0
    %162 = vmatprep.mubr.f32.mxu0 0.0
    %163 = vmatmul.mubr.f32.gmra.mxu0 %v67
    %v164 = vpop.f32.mrf.mxu0
    %v165 = vadd.f32 %v52, %v164
    %v166 = vpop.f32.mrf.mxu0
    %167 = vmatprep.mubr.f32.mxu0 0.0
    %168 = vmatmul.mubr.f32.gmra.mxu0 %v70
    %v169 = vpop.f32.mrf.mxu0
    %v170 = vadd.f32 %v52, %v169
    %v171 = vpop.f32.mrf.mxu0
    %172 = vmatprep.mubr.f32.mxu0 0.0
    %173 = vmatmul.mubr.f32.gmra.mxu0 %v73
    %v174 = vpop.f32.mrf.mxu0
    %v175 = vadd.f32 %v52, %v174
    %v176 = vpop.f32.mrf.mxu0
    %177 = vmatprep.mubr.f32.mxu0 0.0
    %178 = vmatmul.mubr.f32.gmra.mxu0 %v76
    %v179 = vpop.f32.mrf.mxu0
    %v180 = vadd.f32 %v52, %v179
    %v181 = vpop.f32.mrf.mxu0
    %182 = vdwg.mxu0
    %vm183 = vcmask 261120
    %v184 = vsel %vm183, %v145, 0.0
    %185 = vadd.xlane.f32.xlu0 %v184
    %v186 = vpop.xlane.xlu0 %185
    %v187 = vsel %vm183, %v150, 0.0
    %188 = vadd.xlane.f32.xlu0 %v187
    %v189 = vpop.xlane.xlu0 %188
    %v190 = vsel %vm183, %v155, 0.0
    %191 = vadd.xlane.f32.xlu0 %v190
    %v192 = vpop.xlane.xlu0 %191
    %v193 = vsel %vm183, %v160, 0.0
    %194 = vadd.xlane.f32.xlu0 %v193
    %v195 = vpop.xlane.xlu0 %194
    %v196 = vsel %vm183, %v165, 0.0
    %197 = vadd.xlane.f32.xlu0 %v196
    %v198 = vpop.xlane.xlu0 %197
    %v199 = vsel %vm183, %v170, 0.0
    %200 = vadd.xlane.f32.xlu0 %v199
    %v201 = vpop.xlane.xlu0 %200
    %v202 = vsel %vm183, %v175, 0.0
    %203 = vadd.xlane.f32.xlu0 %v202
    %v204 = vpop.xlane.xlu0 %203
    %v205 = vsel %vm183, %v180, 0.0
    %206 = vadd.xlane.f32.xlu0 %v205
    %v207 = vpop.xlane.xlu0 %206
    %v208 = vrcp.pop 32.0
    %v209 = vmul.f32 %v186, %v208
    %v210 = vmul.f32 %v189, %v208
    %v211 = vmul.f32 %v192, %v208
    %v212 = vmul.f32 %v195, %v208
    %v213 = vmul.f32 %v198, %v208
    %v214 = vmul.f32 %v201, %v208
    %v215 = vmul.f32 %v204, %v208
    %v216 = vmul.f32 %v207, %v208
    %v217 = vsub.f32 %v145, %v209
    %v218 = vsub.f32 %v150, %v210
    %v219 = vsub.f32 %v155, %v211
    %v220 = vsub.f32 %v160, %v212
    %v221 = vsub.f32 %v165, %v213
    %v222 = vsub.f32 %v170, %v214
    %v223 = vsub.f32 %v175, %v215
    %v224 = vsub.f32 %v180, %v216
    %v225 = vmul.f32 %v217, %v217
    %v226 = vmul.f32 %v218, %v218
    %v227 = vmul.f32 %v219, %v219
    %v228 = vmul.f32 %v220, %v220
    %v229 = vmul.f32 %v221, %v221
    %v230 = vmul.f32 %v222, %v222
    %v231 = vmul.f32 %v223, %v223
    %v232 = vmul.f32 %v224, %v224
    %v233 = vsel %vm183, %v225, 0.0
    %234 = vadd.xlane.f32.xlu0 %v233
    %v235 = vpop.xlane.xlu0 %234
    %v236 = vsel %vm183, %v226, 0.0
    %237 = vadd.xlane.f32.xlu0 %v236
    %v238 = vpop.xlane.xlu0 %237
    %v239 = vsel %vm183, %v227, 0.0
    %240 = vadd.xlane.f32.xlu0 %v239
    %v241 = vpop.xlane.xlu0 %240
    %v242 = vsel %vm183, %v228, 0.0
    %243 = vadd.xlane.f32.xlu0 %v242
    %v244 = vpop.xlane.xlu0 %243
    %v245 = vsel %vm183, %v229, 0.0
    %246 = vadd.xlane.f32.xlu0 %v245
    %v247 = vpop.xlane.xlu0 %246
    %v248 = vsel %vm183, %v230, 0.0
    %249 = vadd.xlane.f32.xlu0 %v248
    %v250 = vpop.xlane.xlu0 %249
    %v251 = vsel %vm183, %v231, 0.0
    %252 = vadd.xlane.f32.xlu0 %v251
    %v253 = vpop.xlane.xlu0 %252
    %v254 = vsel %vm183, %v232, 0.0
    %255 = vadd.xlane.f32.xlu0 %v254
    %v256 = vpop.xlane.xlu0 %255
    %v257 = vmul.f32 %v235, %v208
    %v258 = vmul.f32 %v238, %v208
    %v259 = vmul.f32 %v241, %v208
    %v260 = vmul.f32 %v244, %v208
    %v261 = vmul.f32 %v247, %v208
    %v262 = vmul.f32 %v250, %v208
    %v263 = vmul.f32 %v253, %v208
    %v264 = vmul.f32 %v256, %v208
    %v265 = vadd.f32 %v257, 1e-05
    %v266 = vadd.f32 %v258, 1e-05
    %v267 = vadd.f32 %v259, 1e-05
    %v268 = vadd.f32 %v260, 1e-05
    %v269 = vadd.f32 %v261, 1e-05
    %v270 = vadd.f32 %v262, 1e-05
    %v271 = vadd.f32 %v263, 1e-05
    %v272 = vadd.f32 %v264, 1e-05
    %v273 = vrsqrt.pop %v265
    %v274 = vrsqrt.pop %v266
    %v275 = vrsqrt.pop %v267
    %v276 = vrsqrt.pop %v268
    %v277 = vrsqrt.pop %v269
    %v278 = vrsqrt.pop %v270
    %v279 = vrsqrt.pop %v271
    %v280 = vrsqrt.pop %v272
    %v281 = vmul.f32 %v217, %v273
    %v282 = vmul.f32 %v218, %v274
    %v283 = vmul.f32 %v219, %v275
    %v284 = vmul.f32 %v220, %v276
    %v285 = vmul.f32 %v221, %v277
    %v286 = vmul.f32 %v222, %v278
    %v287 = vmul.f32 %v223, %v279
    %v288 = vmul.f32 %v224, %v280
    %v289 = vlaneseq
    %v290 = vshrl.u32 %v289, 7
    %v291 = vsub.s32 0, %v290
    %v292 = vrot.slane %v32, %v291
    %v293 = vmul.f32 %v281, %v292
    %v294 = vmul.f32 %v282, %v292
    %v295 = vmul.f32 %v283, %v292
    %v296 = vmul.f32 %v284, %v292
    %v297 = vmul.f32 %v285, %v292
    %v298 = vmul.f32 %v286, %v292
    %v299 = vmul.f32 %v287, %v292
    %v300 = vmul.f32 %v288, %v292
    %v301 = vlaneseq
    %v302 = vshrl.u32 %v301, 7
    %v303 = vsub.s32 0, %v302
    %v304 = vrot.slane %v33, %v303
    %v305 = vadd.f32 %v293, %v304
    %v306 = vadd.f32 %v294, %v304
    %v307 = vadd.f32 %v295, %v304
    %v308 = vadd.f32 %v296, %v304
    %v309 = vadd.f32 %v297, %v304
    %v310 = vadd.f32 %v298, %v304
    %v311 = vadd.f32 %v299, %v304
    %v312 = vadd.f32 %v300, %v304
    %v313 = vmax.f32 %v305, 0.0
    %v314 = vmax.f32 %v306, 0.0
    %v315 = vmax.f32 %v307, 0.0
    %v316 = vmax.f32 %v308, 0.0
    %v317 = vmax.f32 %v309, 0.0
    %v318 = vmax.f32 %v310, 0.0
    %v319 = vmax.f32 %v311, 0.0
    %v320 = vmax.f32 %v312, 0.0
    %v321 = vld [vmem:[#allocation2] sm:$0xff]
    %v322 = vld [vmem:[#allocation2 + $0x8] sm:$0xff]
    %v323 = vld [vmem:[#allocation2 + $0x10] sm:$0xff]
    %v324 = vld [vmem:[#allocation2 + $0x18] sm:$0xff]
    %v325 = vld [vmem:[#allocation2 + $0x20] sm:$0xff]
    %v326 = vld [vmem:[#allocation2 + $0x28] sm:$0xff]
    %v327 = vld [vmem:[#allocation2 + $0x30] sm:$0xff]
    %v328 = vld [vmem:[#allocation2 + $0x38] sm:$0xff]
    %v329 = vld [vmem:[#allocation2 + $0x40] sm:$0xff]
    %v330 = vld [vmem:[#allocation2 + $0x48] sm:$0xff]
    %v331 = vld [vmem:[#allocation2 + $0x50] sm:$0xff]
    %v332 = vld [vmem:[#allocation2 + $0x58] sm:$0xff]
    %v334 = vsel %vm183, %v313, 0
    %v337 = vsel %vm183, %v314, 0
    %v340 = vsel %vm183, %v315, 0
    %v343 = vsel %vm183, %v316, 0
    %v346 = vsel %vm183, %v317, 0
    %v349 = vsel %vm183, %v318, 0
    %v352 = vsel %vm183, %v319, 0
    %v355 = vsel %vm183, %v320, 0
    %357 = vmatprep.subr.mxu0 0.0
    %358 = vmatpush1.msra.mxu0 0.0
    %359 = vmatprep.subr.mxu0 0.0
    %360 = vmatpush1.msra.mxu0 0.0
    %361 = vmatprep.subr.mxu0 0.0
    %362 = vmatpush1.msra.mxu0 0.0
    %363 = vmatprep.subr.mxu0 0.0
    %364 = vmatpush1.msra.mxu0 0.0
    %365 = vmatprep.subr.mxu0 0.0
    %366 = vmatpush1.msra.mxu0 0.0
    %367 = vmatprep.subr.mxu0 0.0
    %368 = vmatpush1.msra.mxu0 0.0
    %369 = vmatprep.subr.mxu0 0.0
    %370 = vmatpush1.msra.mxu0 0.0
    %371 = vmatprep.subr.mxu0 0.0
    %372 = vmatpush1.msra.mxu0 0.0
    %373 = vmatprep.subr.mxu0 0.0
    %374 = vmatpush1.msra.mxu0 0.0
    %375 = vmatprep.subr.mxu0 0.0
    %376 = vmatpush1.msra.mxu0 0.0
    %377 = vmatprep.subr.mxu0 0.0
    %378 = vmatpush1.msra.mxu0 0.0
    %379 = vmatprep.subr.mxu0 0.0
    %380 = vmatpush1.msra.mxu0 0.0
    %381 = vmatprep.subr.mxu0 %v331
    %382 = vmatpush1.msra.mxu0 %v330
    %383 = vmatprep.subr.mxu0 %v328
    %384 = vmatpush1.msra.mxu0 %v327
    %385 = vmatprep.subr.mxu0 %v325
    %386 = vmatpush1.msra.mxu0 %v324
    %387 = vmatprep.subr.mxu0 %v322
    %388 = vmatpush1.msra.mxu0 %v321
    %389 = vmatprep.subr.mxu0 0.0
    %390 = vmatpush2.msra.mxu0 0.0
    %391 = vmatprep.subr.mxu0 0.0
    %392 = vmatpush2.msra.mxu0 0.0
    %393 = vmatprep.subr.mxu0 0.0
    %394 = vmatpush2.msra.mxu0 0.0
    %395 = vmatprep.subr.mxu0 0.0
    %396 = vmatpush2.msra.mxu0 0.0
    %397 = vmatprep.subr.mxu0 0.0
    %398 = vmatpush2.msra.mxu0 0.0
    %399 = vmatprep.subr.mxu0 0.0
    %400 = vmatpush2.msra.mxu0 0.0
    %401 = vmatprep.subr.mxu0 0.0
    %402 = vmatpush2.msra.mxu0 0.0
    %403 = vmatprep.subr.mxu0 0.0
    %404 = vmatpush2.msra.mxu0 0.0
    %405 = vmatprep.subr.mxu0 0.0
    %406 = vmatpush2.msra.mxu0 0.0
    %407 = vmatprep.subr.mxu0 0.0
    %408 = vmatpush2.msra.mxu0 0.0
    %409 = vmatprep.subr.mxu0 0.0
    %410 = vmatpush2.msra.mxu0 0.0
    %411 = vmatprep.subr.mxu0 0.0
    %412 = vmatpush2.msra.mxu0 0.0
    %413 = vmatprep.subr.mxu0 0.0
    %414 = vmatpush2.msra.mxu0 0.0
    %415 = vmatprep.subr.mxu0 0.0
    %416 = vmatpush2.msra.mxu0 0.0
    %417 = vmatprep.subr.mxu0 0.0
    %418 = vmatpush2.msra.mxu0 0.0
    %419 = vmatprep.subr.mxu0 0.0
    %420 = vmatpush2.msra.mxu0 0.0
    %421 = vmatprep.mubr.f32.mxu0 0.0
    %422 = vmatmul.mubr.f32.gmra.mxu0 %v334
    %v423 = vpop.f32.mrf.mxu0
    %v424 = vadd.f32 0.0, %v423
    %v425 = vpop.f32.mrf.mxu0
    %v426 = vadd.f32 0.0, %v425
    %427 = vmatprep.mubr.f32.mxu0 0.0
    %428 = vmatmul.mubr.f32.gmra.mxu0 %v337
    %v429 = vpop.f32.mrf.mxu0
    %v430 = vadd.f32 0.0, %v429
    %v431 = vpop.f32.mrf.mxu0
    %v432 = vadd.f32 0.0, %v431
    %433 = vmatprep.mubr.f32.mxu0 0.0
    %434 = vmatmul.mubr.f32.gmra.mxu0 %v340
    %v435 = vpop.f32.mrf.mxu0
    %v436 = vadd.f32 0.0, %v435
    %v437 = vpop.f32.mrf.mxu0
    %v438 = vadd.f32 0.0, %v437
    %439 = vmatprep.mubr.f32.mxu0 0.0
    %440 = vmatmul.mubr.f32.gmra.mxu0 %v343
    %v441 = vpop.f32.mrf.mxu0
    %v442 = vadd.f32 0.0, %v441
    %v443 = vpop.f32.mrf.mxu0
    %v444 = vadd.f32 0.0, %v443
    %445 = vmatprep.mubr.f32.mxu0 0.0
    %446 = vmatmul.mubr.f32.gmra.mxu0 %v346
    %v447 = vpop.f32.mrf.mxu0
    %v448 = vadd.f32 0.0, %v447
    %v449 = vpop.f32.mrf.mxu0
    %v450 = vadd.f32 0.0, %v449
    %451 = vmatprep.mubr.f32.mxu0 0.0
    %452 = vmatmul.mubr.f32.gmra.mxu0 %v349
    %v453 = vpop.f32.mrf.mxu0
    %v454 = vadd.f32 0.0, %v453
    %v455 = vpop.f32.mrf.mxu0
    %v456 = vadd.f32 0.0, %v455
    %457 = vmatprep.mubr.f32.mxu0 0.0
    %458 = vmatmul.mubr.f32.gmra.mxu0 %v352
    %v459 = vpop.f32.mrf.mxu0
    %v460 = vadd.f32 0.0, %v459
    %v461 = vpop.f32.mrf.mxu0
    %v462 = vadd.f32 0.0, %v461
    %463 = vmatprep.mubr.f32.mxu0 0.0
    %464 = vmatmul.mubr.f32.gmra.mxu0 %v355
    %v465 = vpop.f32.mrf.mxu0
    %v466 = vadd.f32 0.0, %v465
    %v467 = vpop.f32.mrf.mxu0
    %v468 = vadd.f32 0.0, %v467
    %469 = vdwg.mxu0
    %470 = vmatprep.subr.mxu0 0.0
    %471 = vmatpush1.msra.mxu0 0.0
    %472 = vmatprep.subr.mxu0 0.0
    %473 = vmatpush1.msra.mxu0 0.0
    %474 = vmatprep.subr.mxu0 0.0
    %475 = vmatpush1.msra.mxu0 0.0
    %476 = vmatprep.subr.mxu0 0.0
    %477 = vmatpush1.msra.mxu0 0.0
    %478 = vmatprep.subr.mxu0 0.0
    %479 = vmatpush1.msra.mxu0 0.0
    %480 = vmatprep.subr.mxu0 0.0
    %481 = vmatpush1.msra.mxu0 0.0
    %482 = vmatprep.subr.mxu0 0.0
    %483 = vmatpush1.msra.mxu0 0.0
    %484 = vmatprep.subr.mxu0 0.0
    %485 = vmatpush1.msra.mxu0 0.0
    %486 = vmatprep.subr.mxu0 0.0
    %487 = vmatpush1.msra.mxu0 0.0
    %488 = vmatprep.subr.mxu0 0.0
    %489 = vmatpush1.msra.mxu0 0.0
    %490 = vmatprep.subr.mxu0 0.0
    %491 = vmatpush1.msra.mxu0 0.0
    %492 = vmatprep.subr.mxu0 0.0
    %493 = vmatpush1.msra.mxu0 0.0
    %494 = vmatprep.subr.mxu0 0.0
    %495 = vmatpush1.msra.mxu0 %v332
    %496 = vmatprep.subr.mxu0 0.0
    %497 = vmatpush1.msra.mxu0 %v329
    %498 = vmatprep.subr.mxu0 0.0
    %499 = vmatpush1.msra.mxu0 %v326
    %500 = vmatprep.subr.mxu0 0.0
    %501 = vmatpush1.msra.mxu0 %v323
    %502 = vmatprep.subr.mxu0 0.0
    %503 = vmatpush2.msra.mxu0 0.0
    %504 = vmatprep.subr.mxu0 0.0
    %505 = vmatpush2.msra.mxu0 0.0
    %506 = vmatprep.subr.mxu0 0.0
    %507 = vmatpush2.msra.mxu0 0.0
    %508 = vmatprep.subr.mxu0 0.0
    %509 = vmatpush2.msra.mxu0 0.0
    %510 = vmatprep.subr.mxu0 0.0
    %511 = vmatpush2.msra.mxu0 0.0
    %512 = vmatprep.subr.mxu0 0.0
    %513 = vmatpush2.msra.mxu0 0.0
    %514 = vmatprep.subr.mxu0 0.0
    %515 = vmatpush2.msra.mxu0 0.0
    %516 = vmatprep.subr.mxu0 0.0
    %517 = vmatpush2.msra.mxu0 0.0
    %518 = vmatprep.subr.mxu0 0.0
    %519 = vmatpush2.msra.mxu0 0.0
    %520 = vmatprep.subr.mxu0 0.0
    %521 = vmatpush2.msra.mxu0 0.0
    %522 = vmatprep.subr.mxu0 0.0
    %523 = vmatpush2.msra.mxu0 0.0
    %524 = vmatprep.subr.mxu0 0.0
    %525 = vmatpush2.msra.mxu0 0.0
    %526 = vmatprep.subr.mxu0 0.0
    %527 = vmatpush2.msra.mxu0 0.0
    %528 = vmatprep.subr.mxu0 0.0
    %529 = vmatpush2.msra.mxu0 0.0
    %530 = vmatprep.subr.mxu0 0.0
    %531 = vmatpush2.msra.mxu0 0.0
    %532 = vmatprep.subr.mxu0 0.0
    %533 = vmatpush2.msra.mxu0 0.0
    %534 = vmatprep.mubr.f32.mxu0 0.0
    %535 = vmatmul.mubr.f32.gmra.mxu0 %v334
    %v536 = vpop.f32.mrf.mxu0
    %v537 = vadd.f32 0.0, %v536
    %v538 = vpop.f32.mrf.mxu0
    %539 = vmatprep.mubr.f32.mxu0 0.0
    %540 = vmatmul.mubr.f32.gmra.mxu0 %v337
    %v541 = vpop.f32.mrf.mxu0
    %v542 = vadd.f32 0.0, %v541
    %v543 = vpop.f32.mrf.mxu0
    %544 = vmatprep.mubr.f32.mxu0 0.0
    %545 = vmatmul.mubr.f32.gmra.mxu0 %v340
    %v546 = vpop.f32.mrf.mxu0
    %v547 = vadd.f32 0.0, %v546
    %v548 = vpop.f32.mrf.mxu0
    %549 = vmatprep.mubr.f32.mxu0 0.0
    %550 = vmatmul.mubr.f32.gmra.mxu0 %v343
    %v551 = vpop.f32.mrf.mxu0
    %v552 = vadd.f32 0.0, %v551
    %v553 = vpop.f32.mrf.mxu0
    %554 = vmatprep.mubr.f32.mxu0 0.0
    %555 = vmatmul.mubr.f32.gmra.mxu0 %v346
    %v556 = vpop.f32.mrf.mxu0
    %v557 = vadd.f32 0.0, %v556
    %v558 = vpop.f32.mrf.mxu0
    %559 = vmatprep.mubr.f32.mxu0 0.0
    %560 = vmatmul.mubr.f32.gmra.mxu0 %v349
    %v561 = vpop.f32.mrf.mxu0
    %v562 = vadd.f32 0.0, %v561
    %v563 = vpop.f32.mrf.mxu0
    %564 = vmatprep.mubr.f32.mxu0 0.0
    %565 = vmatmul.mubr.f32.gmra.mxu0 %v352
    %v566 = vpop.f32.mrf.mxu0
    %v567 = vadd.f32 0.0, %v566
    %v568 = vpop.f32.mrf.mxu0
    %569 = vmatprep.mubr.f32.mxu0 0.0
    %570 = vmatmul.mubr.f32.gmra.mxu0 %v355
    %v571 = vpop.f32.mrf.mxu0
    %v572 = vadd.f32 0.0, %v571
    %v573 = vpop.f32.mrf.mxu0
    %574 = vdwg.mxu0
    %v575 = vlaneseq
    %v576 = vshrl.u32 %v575, 7
    %v577 = vsub.s32 0, %v576
    %v578 = vrot.slane %v36, %v577
    %v579 = vadd.f32 %v424, %v578
    %v580 = vadd.f32 %v430, %v578
    %v581 = vadd.f32 %v436, %v578
    %v582 = vadd.f32 %v442, %v578
    %v583 = vadd.f32 %v448, %v578
    %v584 = vadd.f32 %v454, %v578
    %v585 = vadd.f32 %v460, %v578
    %v586 = vadd.f32 %v466, %v578
    %v587 = vlaneseq
    %v588 = vshrl.u32 %v587, 7
    %v589 = vsub.s32 0, %v588
    %v590 = vrot.slane %v37, %v589
    %v591 = vadd.f32 %v426, %v590
    %v592 = vadd.f32 %v432, %v590
    %v593 = vadd.f32 %v438, %v590
    %v594 = vadd.f32 %v444, %v590
    %v595 = vadd.f32 %v450, %v590
    %v596 = vadd.f32 %v456, %v590
    %v597 = vadd.f32 %v462, %v590
    %v598 = vadd.f32 %v468, %v590
    %v599 = vlaneseq
    %v600 = vshrl.u32 %v599, 7
    %v601 = vsub.s32 0, %v600
    %v602 = vrot.slane %v38, %v601
    %v603 = vadd.f32 %v537, %v602
    %v604 = vadd.f32 %v542, %v602
    %v605 = vadd.f32 %v547, %v602
    %v606 = vadd.f32 %v552, %v602
    %v607 = vadd.f32 %v557, %v602
    %v608 = vadd.f32 %v562, %v602
    %v609 = vadd.f32 %v567, %v602
    %v610 = vadd.f32 %v572, %v602
    %v611 = vmul.f32 %v579, %v579
    %v612 = vmul.f32 %v580, %v580
    %v613 = vmul.f32 %v581, %v581
    %v614 = vmul.f32 %v582, %v582
    %v615 = vmul.f32 %v583, %v583
    %v616 = vmul.f32 %v584, %v584
    %v617 = vmul.f32 %v585, %v585
    %v618 = vmul.f32 %v586, %v586
    %v619 = vadd.f32 %v611, %v612
    %v620 = vadd.f32 %v619, %v613
    %v621 = vadd.f32 %v620, %v614
    %v622 = vadd.f32 %v621, %v615
    %v623 = vadd.f32 %v622, %v616
    %v624 = vadd.f32 %v623, %v617
    %v625 = vadd.f32 %v624, %v618
    %626 = vadd.xlane.f32.xlu0 %v625
    %v627 = vpop.xlane.xlu0 %626
    %v628 = vrot.slane %v627, 4
    %v629 = vadd.f32 %v627, %v628
    %v630 = vrot.slane %v629, 2
    %v631 = vadd.f32 %v629, %v630
    %v632 = vrot.slane %v631, 1
    %v633 = vadd.f32 %v631, %v632
    %s634 = vtos %v633
    %v635 = vstv %s634
    %v636 = vrsqrt.pop %v635
    %s637 = vtos %v636
    %v638 = vstv %s637
    %v639 = vmul.f32 %v579, %v638
    %v640 = vmul.f32 %v580, %v638
    %v641 = vmul.f32 %v581, %v638
    %v642 = vmul.f32 %v582, %v638
    %v643 = vmul.f32 %v583, %v638
    %v644 = vmul.f32 %v584, %v638
    %v645 = vmul.f32 %v585, %v638
    %v646 = vmul.f32 %v586, %v638
    %v647 = vmul.f32 %v591, %v591
    %v648 = vmul.f32 %v592, %v592
    %v649 = vmul.f32 %v593, %v593
    %v650 = vmul.f32 %v594, %v594
    %v651 = vmul.f32 %v595, %v595
    %v652 = vmul.f32 %v596, %v596
    %v653 = vmul.f32 %v597, %v597
    %v654 = vmul.f32 %v598, %v598
    %v655 = vadd.f32 %v647, %v648
    %v656 = vadd.f32 %v655, %v649
    %v657 = vadd.f32 %v656, %v650
    %v658 = vadd.f32 %v657, %v651
    %v659 = vadd.f32 %v658, %v652
    %v660 = vadd.f32 %v659, %v653
    %v661 = vadd.f32 %v660, %v654
    %662 = vadd.xlane.f32.xlu0 %v661
    %v663 = vpop.xlane.xlu0 %662
    %v664 = vrot.slane %v663, 4
    %v665 = vadd.f32 %v663, %v664
    %v666 = vrot.slane %v665, 2
    %v667 = vadd.f32 %v665, %v666
    %v668 = vrot.slane %v667, 1
    %v669 = vadd.f32 %v667, %v668
    %s670 = vtos %v669
    %v671 = vstv %s670
    %v672 = vrsqrt.pop %v671
    %s673 = vtos %v672
    %v674 = vstv %s673
    %v675 = vmul.f32 %v591, %v674
    %v676 = vmul.f32 %v592, %v674
    %v677 = vmul.f32 %v593, %v674
    %v678 = vmul.f32 %v594, %v674
    %v679 = vmul.f32 %v595, %v674
    %v680 = vmul.f32 %v596, %v674
    %v681 = vmul.f32 %v597, %v674
    %v682 = vmul.f32 %v598, %v674
    %v683 = vlaneseq
    %v684 = vshrl.u32 %v683, 7
    %v685 = vadd.s32 %v684, 8
    %v686 = vadd.s32 %v684, 16
    %v687 = vadd.s32 %v684, 24
    %v688 = vadd.s32 %v684, 32
    %v689 = vadd.s32 %v684, 40
    %v690 = vadd.s32 %v684, 48
    %v691 = vadd.s32 %v684, 56
    %v692 = vadd.s32 %v684, 64
    %v693 = vadd.s32 %v684, 72
    %v694 = vadd.s32 %v684, 80
    %v695 = vadd.s32 %v684, 88
    %v696 = vadd.s32 %v684, 96
    %v697 = vadd.s32 %v684, 104
    %v698 = vadd.s32 %v684, 112
    %v699 = vadd.s32 %v684, 120
    %v700 = vlaneseq
    %v701 = vand.u32 %v700, 127
    %vm702 = vcmp.ge.s32.totalorder %v684, 0
    %vm703 = vcmp.ge.s32.totalorder %v685, 0
    %vm704 = vcmp.ge.s32.totalorder %v686, 0
    %vm705 = vcmp.ge.s32.totalorder %v687, 0
    %vm706 = vcmp.ge.s32.totalorder %v688, 0
    %vm707 = vcmp.ge.s32.totalorder %v689, 0
    %vm708 = vcmp.ge.s32.totalorder %v690, 0
    %vm709 = vcmp.ge.s32.totalorder %v691, 0
    %vm710 = vcmp.ge.s32.totalorder %v692, 0
    %vm711 = vcmp.ge.s32.totalorder %v693, 0
    %vm712 = vcmp.ge.s32.totalorder %v694, 0
    %vm713 = vcmp.ge.s32.totalorder %v695, 0
    %vm714 = vcmp.ge.s32.totalorder %v696, 0
    %vm715 = vcmp.ge.s32.totalorder %v697, 0
    %vm716 = vcmp.ge.s32.totalorder %v698, 0
    %vm717 = vcmp.ge.s32.totalorder %v699, 0
    %vm718 = vcmp.lt.s32.totalorder %v684, 32
    %vm719 = vcmp.lt.s32.totalorder %v685, 32
    %vm720 = vcmp.lt.s32.totalorder %v686, 32
    %vm721 = vcmp.lt.s32.totalorder %v687, 32
    %vm722 = vcmp.lt.s32.totalorder %v688, 32
    %vm723 = vcmp.lt.s32.totalorder %v689, 32
    %vm724 = vcmp.lt.s32.totalorder %v690, 32
    %vm725 = vcmp.lt.s32.totalorder %v691, 32
    %vm726 = vcmp.lt.s32.totalorder %v692, 32
    %vm727 = vcmp.lt.s32.totalorder %v693, 32
    %vm728 = vcmp.lt.s32.totalorder %v694, 32
    %vm729 = vcmp.lt.s32.totalorder %v695, 32
    %vm730 = vcmp.lt.s32.totalorder %v696, 32
    %vm731 = vcmp.lt.s32.totalorder %v697, 32
    %vm732 = vcmp.lt.s32.totalorder %v698, 32
    %vm733 = vcmp.lt.s32.totalorder %v699, 32
    %vm734 = vmand %vm702, %vm718
    %vm735 = vmand %vm703, %vm719
    %vm736 = vmand %vm704, %vm720
    %vm737 = vmand %vm705, %vm721
    %vm738 = vmand %vm706, %vm722
    %vm739 = vmand %vm707, %vm723
    %vm740 = vmand %vm708, %vm724
    %vm741 = vmand %vm709, %vm725
    %vm742 = vmand %vm710, %vm726
    %vm743 = vmand %vm711, %vm727
    %vm744 = vmand %vm712, %vm728
    %vm745 = vmand %vm713, %vm729
    %vm746 = vmand %vm714, %vm730
    %vm747 = vmand %vm715, %vm731
    %vm748 = vmand %vm716, %vm732
    %vm749 = vmand %vm717, %vm733
    %vm750 = vcmp.ge.s32.totalorder %v701, 0
    %vm751 = vmand %vm734, %vm750
    %vm752 = vmand %vm735, %vm750
    %vm753 = vmand %vm736, %vm750
    %vm754 = vmand %vm737, %vm750
    %vm755 = vmand %vm738, %vm750
    %vm756 = vmand %vm739, %vm750
    %vm757 = vmand %vm740, %vm750
    %vm758 = vmand %vm741, %vm750
    %vm759 = vmand %vm742, %vm750
    %vm760 = vmand %vm743, %vm750
    %vm761 = vmand %vm744, %vm750
    %vm762 = vmand %vm745, %vm750
    %vm763 = vmand %vm746, %vm750
    %vm764 = vmand %vm747, %vm750
    %vm765 = vmand %vm748, %vm750
    %vm766 = vmand %vm749, %vm750
    %vm767 = vcmp.lt.s32.totalorder %v701, 32
    %vm768 = vmand %vm751, %vm767
    %vm769 = vmand %vm752, %vm767
    %vm770 = vmand %vm753, %vm767
    %vm771 = vmand %vm754, %vm767
    %vm772 = vmand %vm755, %vm767
    %vm773 = vmand %vm756, %vm767
    %vm774 = vmand %vm757, %vm767
    %vm775 = vmand %vm758, %vm767
    %vm776 = vmand %vm759, %vm767
    %vm777 = vmand %vm760, %vm767
    %vm778 = vmand %vm761, %vm767
    %vm779 = vmand %vm762, %vm767
    %vm780 = vmand %vm763, %vm767
    %vm781 = vmand %vm764, %vm767
    %vm782 = vmand %vm765, %vm767
    %vm783 = vmand %vm766, %vm767
    %vm784 = vcmp.eq.s32.totalorder %v684, %v701
    %vm785 = vcmp.eq.s32.totalorder %v685, %v701
    %vm786 = vcmp.eq.s32.totalorder %v686, %v701
    %vm787 = vcmp.eq.s32.totalorder %v687, %v701
    %vm788 = vcmp.eq.s32.totalorder %v688, %v701
    %vm789 = vcmp.eq.s32.totalorder %v689, %v701
    %vm790 = vcmp.eq.s32.totalorder %v690, %v701
    %vm791 = vcmp.eq.s32.totalorder %v691, %v701
    %vm792 = vcmp.eq.s32.totalorder %v692, %v701
    %vm793 = vcmp.eq.s32.totalorder %v693, %v701
    %vm794 = vcmp.eq.s32.totalorder %v694, %v701
    %vm795 = vcmp.eq.s32.totalorder %v695, %v701
    %vm796 = vcmp.eq.s32.totalorder %v696, %v701
    %vm797 = vcmp.eq.s32.totalorder %v697, %v701
    %vm798 = vcmp.eq.s32.totalorder %v698, %v701
    %vm799 = vcmp.eq.s32.totalorder %v699, %v701
    %vm800 = vcmp.ge.s32.totalorder %v684, 32
    %vm801 = vcmp.ge.s32.totalorder %v685, 32
    %vm802 = vcmp.ge.s32.totalorder %v686, 32
    %vm803 = vcmp.ge.s32.totalorder %v687, 32
    %vm804 = vcmp.ge.s32.totalorder %v688, 32
    %vm805 = vcmp.ge.s32.totalorder %v689, 32
    %vm806 = vcmp.ge.s32.totalorder %v690, 32
    %vm807 = vcmp.ge.s32.totalorder %v691, 32
    %vm808 = vcmp.ge.s32.totalorder %v692, 32
    %vm809 = vcmp.ge.s32.totalorder %v693, 32
    %vm810 = vcmp.ge.s32.totalorder %v694, 32
    %vm811 = vcmp.ge.s32.totalorder %v695, 32
    %vm812 = vcmp.ge.s32.totalorder %v696, 32
    %vm813 = vcmp.ge.s32.totalorder %v697, 32
    %vm814 = vcmp.ge.s32.totalorder %v698, 32
    %vm815 = vcmp.ge.s32.totalorder %v699, 32
    %vm816 = vcmp.lt.s32.totalorder %v684, 64
    %vm817 = vcmp.lt.s32.totalorder %v685, 64
    %vm818 = vcmp.lt.s32.totalorder %v686, 64
    %vm819 = vcmp.lt.s32.totalorder %v687, 64
    %vm820 = vcmp.lt.s32.totalorder %v688, 64
    %vm821 = vcmp.lt.s32.totalorder %v689, 64
    %vm822 = vcmp.lt.s32.totalorder %v690, 64
    %vm823 = vcmp.lt.s32.totalorder %v691, 64
    %vm824 = vcmp.lt.s32.totalorder %v692, 64
    %vm825 = vcmp.lt.s32.totalorder %v693, 64
    %vm826 = vcmp.lt.s32.totalorder %v694, 64
    %vm827 = vcmp.lt.s32.totalorder %v695, 64
    %vm828 = vcmp.lt.s32.totalorder %v696, 64
    %vm829 = vcmp.lt.s32.totalorder %v697, 64
    %vm830 = vcmp.lt.s32.totalorder %v698, 64
    %vm831 = vcmp.lt.s32.totalorder %v699, 64
    %vm832 = vmand %vm800, %vm816
    %vm833 = vmand %vm801, %vm817
    %vm834 = vmand %vm802, %vm818
    %vm835 = vmand %vm803, %vm819
    %vm836 = vmand %vm804, %vm820
    %vm837 = vmand %vm805, %vm821
    %vm838 = vmand %vm806, %vm822
    %vm839 = vmand %vm807, %vm823
    %vm840 = vmand %vm808, %vm824
    %vm841 = vmand %vm809, %vm825
    %vm842 = vmand %vm810, %vm826
    %vm843 = vmand %vm811, %vm827
    %vm844 = vmand %vm812, %vm828
    %vm845 = vmand %vm813, %vm829
    %vm846 = vmand %vm814, %vm830
    %vm847 = vmand %vm815, %vm831
    %vm848 = vcmp.ge.s32.totalorder %v701, 32
    %vm849 = vmand %vm832, %vm848
    %vm850 = vmand %vm833, %vm848
    %vm851 = vmand %vm834, %vm848
    %vm852 = vmand %vm835, %vm848
    %vm853 = vmand %vm836, %vm848
    %vm854 = vmand %vm837, %vm848
    %vm855 = vmand %vm838, %vm848
    %vm856 = vmand %vm839, %vm848
    %vm857 = vmand %vm840, %vm848
    %vm858 = vmand %vm841, %vm848
    %vm859 = vmand %vm842, %vm848
    %vm860 = vmand %vm843, %vm848
    %vm861 = vmand %vm844, %vm848
    %vm862 = vmand %vm845, %vm848
    %vm863 = vmand %vm846, %vm848
    %vm864 = vmand %vm847, %vm848
    %vm865 = vcmp.lt.s32.totalorder %v701, 64
    %vm866 = vmand %vm849, %vm865
    %vm867 = vmand %vm850, %vm865
    %vm868 = vmand %vm851, %vm865
    %vm869 = vmand %vm852, %vm865
    %vm870 = vmand %vm853, %vm865
    %vm871 = vmand %vm854, %vm865
    %vm872 = vmand %vm855, %vm865
    %vm873 = vmand %vm856, %vm865
    %vm874 = vmand %vm857, %vm865
    %vm875 = vmand %vm858, %vm865
    %vm876 = vmand %vm859, %vm865
    %vm877 = vmand %vm860, %vm865
    %vm878 = vmand %vm861, %vm865
    %vm879 = vmand %vm862, %vm865
    %vm880 = vmand %vm863, %vm865
    %vm881 = vmand %vm864, %vm865
    %v882 = vsub.s32 %v684, 32
    %v883 = vsub.s32 %v685, 32
    %v884 = vsub.s32 %v686, 32
    %v885 = vsub.s32 %v687, 32
    %v886 = vsub.s32 %v689, 32
    %v887 = vsub.s32 %v690, 32
    %v888 = vsub.s32 %v691, 32
    %v889 = vsub.s32 %v692, 32
    %v890 = vsub.s32 %v693, 32
    %v891 = vsub.s32 %v694, 32
    %v892 = vsub.s32 %v695, 32
    %v893 = vsub.s32 %v696, 32
    %v894 = vsub.s32 %v697, 32
    %v895 = vsub.s32 %v698, 32
    %v896 = vsub.s32 %v699, 32
    %vm897 = vcmp.eq.s32.totalorder %v882, %v701
    %vm898 = vcmp.eq.s32.totalorder %v883, %v701
    %vm899 = vcmp.eq.s32.totalorder %v884, %v701
    %vm900 = vcmp.eq.s32.totalorder %v885, %v701
    %vm901 = vcmp.eq.s32.totalorder %v886, %v701
    %vm902 = vcmp.eq.s32.totalorder %v887, %v701
    %vm903 = vcmp.eq.s32.totalorder %v888, %v701
    %vm904 = vcmp.eq.s32.totalorder %v889, %v701
    %vm905 = vcmp.eq.s32.totalorder %v890, %v701
    %vm906 = vcmp.eq.s32.totalorder %v891, %v701
    %vm907 = vcmp.eq.s32.totalorder %v892, %v701
    %vm908 = vcmp.eq.s32.totalorder %v893, %v701
    %vm909 = vcmp.eq.s32.totalorder %v894, %v701
    %vm910 = vcmp.eq.s32.totalorder %v895, %v701
    %vm911 = vcmp.eq.s32.totalorder %v896, %v701
    %vm912 = vmor %vm768, %vm866
    %vm913 = vmor %vm769, %vm867
    %vm914 = vmor %vm770, %vm868
    %vm915 = vmor %vm771, %vm869
    %vm916 = vmor %vm772, %vm870
    %vm917 = vmor %vm773, %vm871
    %vm918 = vmor %vm774, %vm872
    %vm919 = vmor %vm775, %vm873
    %vm920 = vmor %vm776, %vm874
    %vm921 = vmor %vm777, %vm875
    %vm922 = vmor %vm778, %vm876
    %vm923 = vmor %vm779, %vm877
    %vm924 = vmor %vm780, %vm878
    %vm925 = vmor %vm781, %vm879
    %vm926 = vmor %vm782, %vm880
    %vm927 = vmor %vm783, %vm881
    %vm928 = vmor %vm784, %vm897
    %vm929 = vmor %vm785, %vm898
    %vm930 = vmor %vm786, %vm899
    %vm931 = vmor %vm787, %vm900
    %vm932 = vmor %vm788, %vm784
    %vm933 = vmor %vm789, %vm901
    %vm934 = vmor %vm790, %vm902
    %vm935 = vmor %vm791, %vm903
    %vm936 = vmor %vm792, %vm904
    %vm937 = vmor %vm793, %vm905
    %vm938 = vmor %vm794, %vm906
    %vm939 = vmor %vm795, %vm907
    %vm940 = vmor %vm796, %vm908
    %vm941 = vmor %vm797, %vm909
    %vm942 = vmor %vm798, %vm910
    %vm943 = vmor %vm799, %vm911
    %v944 = vsel %vm912, 1, 0
    %v945 = vsel %vm913, 1, 0
    %v946 = vsel %vm914, 1, 0
    %v947 = vsel %vm915, 1, 0
    %v948 = vsel %vm916, 1, 0
    %v949 = vsel %vm917, 1, 0
    %v950 = vsel %vm918, 1, 0
    %v951 = vsel %vm919, 1, 0
    %v952 = vsel %vm920, 1, 0
    %v953 = vsel %vm921, 1, 0
    %v954 = vsel %vm922, 1, 0
    %v955 = vsel %vm923, 1, 0
    %v956 = vsel %vm924, 1, 0
    %v957 = vsel %vm925, 1, 0
    %v958 = vsel %vm926, 1, 0
    %v959 = vsel %vm927, 1, 0
    %v960 = vcvt.s32.f32 %v944
    %v961 = vcvt.s32.f32 %v945
    %v962 = vcvt.s32.f32 %v946
    %v963 = vcvt.s32.f32 %v947
    %v964 = vcvt.s32.f32 %v948
    %v965 = vcvt.s32.f32 %v949
    %v966 = vcvt.s32.f32 %v950
    %v967 = vcvt.s32.f32 %v951
    %v968 = vcvt.s32.f32 %v952
    %v969 = vcvt.s32.f32 %v953
    %v970 = vcvt.s32.f32 %v954
    %v971 = vcvt.s32.f32 %v955
    %v972 = vcvt.s32.f32 %v956
    %v973 = vcvt.s32.f32 %v957
    %v974 = vcvt.s32.f32 %v958
    %v975 = vcvt.s32.f32 %v959
    %v976 = vsel %vm928, 1, 0
    %v977 = vsel %vm929, 1, 0
    %v978 = vsel %vm930, 1, 0
    %v979 = vsel %vm931, 1, 0
    %v980 = vsel %vm932, 1, 0
    %v981 = vsel %vm933, 1, 0
    %v982 = vsel %vm934, 1, 0
    %v983 = vsel %vm935, 1, 0
    %v984 = vsel %vm936, 1, 0
    %v985 = vsel %vm937, 1, 0
    %v986 = vsel %vm938, 1, 0
    %v987 = vsel %vm939, 1, 0
    %v988 = vsel %vm940, 1, 0
    %v989 = vsel %vm941, 1, 0
    %v990 = vsel %vm942, 1, 0
    %v991 = vsel %vm943, 1, 0
    %v992 = vcvt.s32.f32 %v976
    %v993 = vcvt.s32.f32 %v977
    %v994 = vcvt.s32.f32 %v978
    %v995 = vcvt.s32.f32 %v979
    %v996 = vcvt.s32.f32 %v980
    %v997 = vcvt.s32.f32 %v981
    %v998 = vcvt.s32.f32 %v982
    %v999 = vcvt.s32.f32 %v983
    %v1000 = vcvt.s32.f32 %v984
    %v1001 = vcvt.s32.f32 %v985
    %v1002 = vcvt.s32.f32 %v986
    %v1003 = vcvt.s32.f32 %v987
    %v1004 = vcvt.s32.f32 %v988
    %v1005 = vcvt.s32.f32 %v989
    %v1006 = vcvt.s32.f32 %v990
    %v1007 = vcvt.s32.f32 %v991
    %v1008 = vmul.f32 %v992, 0.5
    %v1009 = vmul.f32 %v993, 0.5
    %v1010 = vmul.f32 %v994, 0.5
    %v1011 = vmul.f32 %v995, 0.5
    %v1012 = vmul.f32 %v996, 0.5
    %v1013 = vmul.f32 %v997, 0.5
    %v1014 = vmul.f32 %v998, 0.5
    %v1015 = vmul.f32 %v999, 0.5
    %v1016 = vmul.f32 %v1000, 0.5
    %v1017 = vmul.f32 %v1001, 0.5
    %v1018 = vmul.f32 %v1002, 0.5
    %v1019 = vmul.f32 %v1003, 0.5
    %v1020 = vmul.f32 %v1004, 0.5
    %v1021 = vmul.f32 %v1005, 0.5
    %v1022 = vmul.f32 %v1006, 0.5
    %v1023 = vmul.f32 %v1007, 0.5
    %1024 = vxpose.xlu0.b32.start [1/16] %v675, 128
    %1025 = vxpose.xlu0.b32.cont [2/16] %v676, 128
    %1026 = vxpose.xlu0.b32.cont [3/16] %v677, 128
    %1027 = vxpose.xlu0.b32.cont [4/16] %v678, 128
    %1028 = vxpose.xlu0.b32.cont [5/16] %v679, 128
    %1029 = vxpose.xlu0.b32.cont [6/16] %v680, 128
    %1030 = vxpose.xlu0.b32.cont [7/16] %v681, 128
    %1031 = vxpose.xlu0.b32.cont [8/16] %v682, 128
    %1032 = vxpose.xlu0.b32.cont [9/16] 0.0, 128
    %1033 = vxpose.xlu0.b32.cont [10/16] 0.0, 128
    %1034 = vxpose.xlu0.b32.cont [11/16] 0.0, 128
    %1035 = vxpose.xlu0.b32.cont [12/16] 0.0, 128
    %1036 = vxpose.xlu0.b32.cont [13/16] 0.0, 128
    %1037 = vxpose.xlu0.b32.cont [14/16] 0.0, 128
    %1038 = vxpose.xlu0.b32.cont [15/16] 0.0, 128
    %1039 = vxpose.xlu0.b32.end [16/16] 0.0, 128
    %v1040 = vpop.trf.xlu0
    %v1041 = vpop.trf.xlu0
    %v1042 = vpop.trf.xlu0
    %v1043 = vpop.trf.xlu0
    %v1044 = vpop.trf.xlu0
    %v1045 = vpop.trf.xlu0
    %v1046 = vpop.trf.xlu0
    %v1047 = vpop.trf.xlu0
    %v1048 = vpop.trf.xlu0
    %v1049 = vpop.trf.xlu0
    %v1050 = vpop.trf.xlu0
    %v1051 = vpop.trf.xlu0
    %v1052 = vpop.trf.xlu0
    %v1053 = vpop.trf.xlu0
    %v1054 = vpop.trf.xlu0
    %v1055 = vpop.trf.xlu0
    %vm1056 = vcmask 523264
    %v1058 = vsel %vm1056, %v1040, 0
    %v1061 = vsel %vm1056, %v1041, 0
    %v1064 = vsel %vm1056, %v1042, 0
    %v1067 = vsel %vm1056, %v1043, 0
    %v1070 = vsel %vm1056, %v1044, 0
    %v1073 = vsel %vm1056, %v1045, 0
    %v1076 = vsel %vm1056, %v1046, 0
    %v1079 = vsel %vm1056, %v1047, 0
    %v1082 = vsel %vm1056, %v1048, 0
    %v1085 = vsel %vm1056, %v1049, 0
    %v1088 = vsel %vm1056, %v1050, 0
    %v1091 = vsel %vm1056, %v1051, 0
    %v1094 = vsel %vm1056, %v1052, 0
    %v1097 = vsel %vm1056, %v1053, 0
    %v1100 = vsel %vm1056, %v1054, 0
    %v1103 = vsel %vm1056, %v1055, 0
    %1105 = vmatprep.subr.mxu0 0.0
    %1106 = vmatpush1.msra.mxu0 0.0
    %1107 = vmatprep.subr.mxu0 0.0
    %1108 = vmatpush1.msra.mxu0 0.0
    %1109 = vmatprep.subr.mxu0 0.0
    %1110 = vmatpush1.msra.mxu0 0.0
    %1111 = vmatprep.subr.mxu0 0.0
    %1112 = vmatpush1.msra.mxu0 0.0
    %1113 = vmatprep.subr.mxu0 0.0
    %1114 = vmatpush1.msra.mxu0 0.0
    %1115 = vmatprep.subr.mxu0 0.0
    %1116 = vmatpush1.msra.mxu0 0.0
    %1117 = vmatprep.subr.mxu0 0.0
    %1118 = vmatpush1.msra.mxu0 0.0
    %1119 = vmatprep.subr.mxu0 0.0
    %1120 = vmatpush1.msra.mxu0 0.0
    %1121 = vmatprep.subr.mxu0 0.0
    %1122 = vmatpush1.msra.mxu0 %v610
    %1123 = vmatprep.subr.mxu0 0.0
    %1124 = vmatpush1.msra.mxu0 %v609
    %1125 = vmatprep.subr.mxu0 0.0
    %1126 = vmatpush1.msra.mxu0 %v608
    %1127 = vmatprep.subr.mxu0 0.0
    %1128 = vmatpush1.msra.mxu0 %v607
    %1129 = vmatprep.subr.mxu0 0.0
    %1130 = vmatpush1.msra.mxu0 %v606
    %1131 = vmatprep.subr.mxu0 0.0
    %1132 = vmatpush1.msra.mxu0 %v605
    %1133 = vmatprep.subr.mxu0 0.0
    %1134 = vmatpush1.msra.mxu0 %v604
    %1135 = vmatprep.subr.mxu0 0.0
    %1136 = vmatpush1.msra.mxu0 %v603
    %1137 = vmatprep.subr.mxu0 0.0
    %1138 = vmatpush2.msra.mxu0 0.0
    %1139 = vmatprep.subr.mxu0 0.0
    %1140 = vmatpush2.msra.mxu0 0.0
    %1141 = vmatprep.subr.mxu0 0.0
    %1142 = vmatpush2.msra.mxu0 0.0
    %1143 = vmatprep.subr.mxu0 0.0
    %1144 = vmatpush2.msra.mxu0 0.0
    %1145 = vmatprep.subr.mxu0 0.0
    %1146 = vmatpush2.msra.mxu0 0.0
    %1147 = vmatprep.subr.mxu0 0.0
    %1148 = vmatpush2.msra.mxu0 0.0
    %1149 = vmatprep.subr.mxu0 0.0
    %1150 = vmatpush2.msra.mxu0 0.0
    %1151 = vmatprep.subr.mxu0 0.0
    %1152 = vmatpush2.msra.mxu0 0.0
    %1153 = vmatprep.subr.mxu0 0.0
    %1154 = vmatpush2.msra.mxu0 0.0
    %1155 = vmatprep.subr.mxu0 0.0
    %1156 = vmatpush2.msra.mxu0 0.0
    %1157 = vmatprep.subr.mxu0 0.0
    %1158 = vmatpush2.msra.mxu0 0.0
    %1159 = vmatprep.subr.mxu0 0.0
    %1160 = vmatpush2.msra.mxu0 0.0
    %1161 = vmatprep.subr.mxu0 0.0
    %1162 = vmatpush2.msra.mxu0 0.0
    %1163 = vmatprep.subr.mxu0 0.0
    %1164 = vmatpush2.msra.mxu0 0.0
    %1165 = vmatprep.subr.mxu0 0.0
    %1166 = vmatpush2.msra.mxu0 0.0
    %1167 = vmatprep.subr.mxu0 0.0
    %1168 = vmatpush2.msra.mxu0 0.0
    %1169 = vmatprep.mubr.f32.mxu0 0.0
    %1170 = vmatmul.mubr.f32.gmra.mxu0 %v1058
    %v1171 = vpop.f32.mrf.mxu0
    %v1172 = vadd.f32 0.0, %v1171
    %v1173 = vpop.f32.mrf.mxu0
    %1174 = vmatprep.mubr.f32.mxu0 0.0
    %1175 = vmatmul.mubr.f32.gmra.mxu0 %v1061
    %v1176 = vpop.f32.mrf.mxu0
    %v1177 = vadd.f32 0.0, %v1176
    %v1178 = vpop.f32.mrf.mxu0
    %1179 = vmatprep.mubr.f32.mxu0 0.0
    %1180 = vmatmul.mubr.f32.gmra.mxu0 %v1064
    %v1181 = vpop.f32.mrf.mxu0
    %v1182 = vadd.f32 0.0, %v1181
    %v1183 = vpop.f32.mrf.mxu0
    %1184 = vmatprep.mubr.f32.mxu0 0.0
    %1185 = vmatmul.mubr.f32.gmra.mxu0 %v1067
    %v1186 = vpop.f32.mrf.mxu0
    %v1187 = vadd.f32 0.0, %v1186
    %v1188 = vpop.f32.mrf.mxu0
    %1189 = vmatprep.mubr.f32.mxu0 0.0
    %1190 = vmatmul.mubr.f32.gmra.mxu0 %v1070
    %v1191 = vpop.f32.mrf.mxu0
    %v1192 = vadd.f32 0.0, %v1191
    %v1193 = vpop.f32.mrf.mxu0
    %1194 = vmatprep.mubr.f32.mxu0 0.0
    %1195 = vmatmul.mubr.f32.gmra.mxu0 %v1073
    %v1196 = vpop.f32.mrf.mxu0
    %v1197 = vadd.f32 0.0, %v1196
    %v1198 = vpop.f32.mrf.mxu0
    %1199 = vmatprep.mubr.f32.mxu0 0.0
    %1200 = vmatmul.mubr.f32.gmra.mxu0 %v1076
    %v1201 = vpop.f32.mrf.mxu0
    %v1202 = vadd.f32 0.0, %v1201
    %v1203 = vpop.f32.mrf.mxu0
    %1204 = vmatprep.mubr.f32.mxu0 0.0
    %1205 = vmatmul.mubr.f32.gmra.mxu0 %v1079
    %v1206 = vpop.f32.mrf.mxu0
    %v1207 = vadd.f32 0.0, %v1206
    %v1208 = vpop.f32.mrf.mxu0
    %1209 = vmatprep.mubr.f32.mxu0 0.0
    %1210 = vmatmul.mubr.f32.gmra.mxu0 %v1082
    %v1211 = vpop.f32.mrf.mxu0
    %v1212 = vadd.f32 0.0, %v1211
    %v1213 = vpop.f32.mrf.mxu0
    %1214 = vmatprep.mubr.f32.mxu0 0.0
    %1215 = vmatmul.mubr.f32.gmra.mxu0 %v1085
    %v1216 = vpop.f32.mrf.mxu0
    %v1217 = vadd.f32 0.0, %v1216
    %v1218 = vpop.f32.mrf.mxu0
    %1219 = vmatprep.mubr.f32.mxu0 0.0
    %1220 = vmatmul.mubr.f32.gmra.mxu0 %v1088
    %v1221 = vpop.f32.mrf.mxu0
    %v1222 = vadd.f32 0.0, %v1221
    %v1223 = vpop.f32.mrf.mxu0
    %1224 = vmatprep.mubr.f32.mxu0 0.0
    %1225 = vmatmul.mubr.f32.gmra.mxu0 %v1091
    %v1226 = vpop.f32.mrf.mxu0
    %v1227 = vadd.f32 0.0, %v1226
    %v1228 = vpop.f32.mrf.mxu0
    %1229 = vmatprep.mubr.f32.mxu0 0.0
    %1230 = vmatmul.mubr.f32.gmra.mxu0 %v1094
    %v1231 = vpop.f32.mrf.mxu0
    %v1232 = vadd.f32 0.0, %v1231
    %v1233 = vpop.f32.mrf.mxu0
    %1234 = vmatprep.mubr.f32.mxu0 0.0
    %1235 = vmatmul.mubr.f32.gmra.mxu0 %v1097
    %v1236 = vpop.f32.mrf.mxu0
    %v1237 = vadd.f32 0.0, %v1236
    %v1238 = vpop.f32.mrf.mxu0
    %1239 = vmatprep.mubr.f32.mxu0 0.0
    %1240 = vmatmul.mubr.f32.gmra.mxu0 %v1100
    %v1241 = vpop.f32.mrf.mxu0
    %v1242 = vadd.f32 0.0, %v1241
    %v1243 = vpop.f32.mrf.mxu0
    %1244 = vmatprep.mubr.f32.mxu0 0.0
    %1245 = vmatmul.mubr.f32.gmra.mxu0 %v1103
    %v1246 = vpop.f32.mrf.mxu0
    %v1247 = vadd.f32 0.0, %v1246
    %v1248 = vpop.f32.mrf.mxu0
    %1249 = vdwg.mxu0
    %v1250 = vmul.f32 %v1172, %v960
    %v1251 = vmul.f32 %v1177, %v961
    %v1252 = vmul.f32 %v1182, %v962
    %v1253 = vmul.f32 %v1187, %v963
    %v1254 = vmul.f32 %v1192, %v964
    %v1255 = vmul.f32 %v1197, %v965
    %v1256 = vmul.f32 %v1202, %v966
    %v1257 = vmul.f32 %v1207, %v967
    %v1258 = vmul.f32 %v1212, %v968
    %v1259 = vmul.f32 %v1217, %v969
    %v1260 = vmul.f32 %v1222, %v970
    %v1261 = vmul.f32 %v1227, %v971
    %v1262 = vmul.f32 %v1232, %v972
    %v1263 = vmul.f32 %v1237, %v973
    %v1264 = vmul.f32 %v1242, %v974
    %v1265 = vmul.f32 %v1247, %v975
    %v1266 = vmul.f32 %v603, 64.0
    %v1267 = vmul.f32 %v604, 64.0
    %v1268 = vmul.f32 %v605, 64.0
    %v1269 = vmul.f32 %v606, 64.0
    %v1270 = vmul.f32 %v607, 64.0
    %v1271 = vmul.f32 %v608, 64.0
    %v1272 = vmul.f32 %v609, 64.0
    %v1273 = vmul.f32 %v610, 64.0
    %1274 = vmatprep.subr.mxu0 0.0
    %1275 = vmatpush1.msra.mxu0 %v1265
    %1276 = vmatprep.subr.mxu0 0.0
    %1277 = vmatpush1.msra.mxu0 %v1264
    %1278 = vmatprep.subr.mxu0 0.0
    %1279 = vmatpush1.msra.mxu0 %v1263
    %1280 = vmatprep.subr.mxu0 0.0
    %1281 = vmatpush1.msra.mxu0 %v1262
    %1282 = vmatprep.subr.mxu0 0.0
    %1283 = vmatpush1.msra.mxu0 %v1261
    %1284 = vmatprep.subr.mxu0 0.0
    %1285 = vmatpush1.msra.mxu0 %v1260
    %1286 = vmatprep.subr.mxu0 0.0
    %1287 = vmatpush1.msra.mxu0 %v1259
    %1288 = vmatprep.subr.mxu0 0.0
    %1289 = vmatpush1.msra.mxu0 %v1258
    %1290 = vmatprep.subr.mxu0 0.0
    %1291 = vmatpush1.msra.mxu0 %v1257
    %1292 = vmatprep.subr.mxu0 0.0
    %1293 = vmatpush1.msra.mxu0 %v1256
    %1294 = vmatprep.subr.mxu0 0.0
    %1295 = vmatpush1.msra.mxu0 %v1255
    %1296 = vmatprep.subr.mxu0 0.0
    %1297 = vmatpush1.msra.mxu0 %v1254
    %1298 = vmatprep.subr.mxu0 0.0
    %1299 = vmatpush1.msra.mxu0 %v1253
    %1300 = vmatprep.subr.mxu0 0.0
    %1301 = vmatpush1.msra.mxu0 %v1252
    %1302 = vmatprep.subr.mxu0 0.0
    %1303 = vmatpush1.msra.mxu0 %v1251
    %1304 = vmatprep.subr.mxu0 0.0
    %1305 = vmatpush1.msra.mxu0 %v1250
    %1306 = vmatprep.subr.mxu0 0.0
    %1307 = vmatpush2.msra.mxu0 0.0
    %1308 = vmatprep.subr.mxu0 0.0
    %1309 = vmatpush2.msra.mxu0 0.0
    %1310 = vmatprep.subr.mxu0 0.0
    %1311 = vmatpush2.msra.mxu0 0.0
    %1312 = vmatprep.subr.mxu0 0.0
    %1313 = vmatpush2.msra.mxu0 0.0
    %1314 = vmatprep.subr.mxu0 0.0
    %1315 = vmatpush2.msra.mxu0 0.0
    %1316 = vmatprep.subr.mxu0 0.0
    %1317 = vmatpush2.msra.mxu0 0.0
    %1318 = vmatprep.subr.mxu0 0.0
    %1319 = vmatpush2.msra.mxu0 0.0
    %1320 = vmatprep.subr.mxu0 0.0
    %1321 = vmatpush2.msra.mxu0 0.0
    %1322 = vmatprep.subr.mxu0 0.0
    %1323 = vmatpush2.msra.mxu0 0.0
    %1324 = vmatprep.subr.mxu0 0.0
    %1325 = vmatpush2.msra.mxu0 0.0
    %1326 = vmatprep.subr.mxu0 0.0
    %1327 = vmatpush2.msra.mxu0 0.0
    %1328 = vmatprep.subr.mxu0 0.0
    %1329 = vmatpush2.msra.mxu0 0.0
    %1330 = vmatprep.subr.mxu0 0.0
    %1331 = vmatpush2.msra.mxu0 0.0
    %1332 = vmatprep.subr.mxu0 0.0
    %1333 = vmatpush2.msra.mxu0 0.0
    %1334 = vmatprep.subr.mxu0 0.0
    %1335 = vmatpush2.msra.mxu0 0.0
    %1336 = vmatprep.subr.mxu0 0.0
    %1337 = vmatpush2.msra.mxu0 0.0
    %1338 = vmatprep.mubr.f32.mxu0 0.0
    %1339 = vmatmul.mubr.f32.gmra.mxu0 %v639
    %v1340 = vpop.f32.mrf.mxu0
    %v1341 = vadd.f32 %v1266, %v1340
    %v1342 = vpop.f32.mrf.mxu0
    %1343 = vmatprep.mubr.f32.mxu0 0.0
    %1344 = vmatmul.mubr.f32.gmra.mxu0 %v640
    %v1345 = vpop.f32.mrf.mxu0
    %v1346 = vadd.f32 %v1267, %v1345
    %v1347 = vpop.f32.mrf.mxu0
    %1348 = vmatprep.mubr.f32.mxu0 0.0
    %1349 = vmatmul.mubr.f32.gmra.mxu0 %v641
    %v1350 = vpop.f32.mrf.mxu0
    %v1351 = vadd.f32 %v1268, %v1350
    %v1352 = vpop.f32.mrf.mxu0
    %1353 = vmatprep.mubr.f32.mxu0 0.0
    %1354 = vmatmul.mubr.f32.gmra.mxu0 %v642
    %v1355 = vpop.f32.mrf.mxu0
    %v1356 = vadd.f32 %v1269, %v1355
    %v1357 = vpop.f32.mrf.mxu0
    %1358 = vmatprep.mubr.f32.mxu0 0.0
    %1359 = vmatmul.mubr.f32.gmra.mxu0 %v643
    %v1360 = vpop.f32.mrf.mxu0
    %v1361 = vadd.f32 %v1270, %v1360
    %v1362 = vpop.f32.mrf.mxu0
    %1363 = vmatprep.mubr.f32.mxu0 0.0
    %1364 = vmatmul.mubr.f32.gmra.mxu0 %v644
    %v1365 = vpop.f32.mrf.mxu0
    %v1366 = vadd.f32 %v1271, %v1365
    %v1367 = vpop.f32.mrf.mxu0
    %1368 = vmatprep.mubr.f32.mxu0 0.0
    %1369 = vmatmul.mubr.f32.gmra.mxu0 %v645
    %v1370 = vpop.f32.mrf.mxu0
    %v1371 = vadd.f32 %v1272, %v1370
    %v1372 = vpop.f32.mrf.mxu0
    %1373 = vmatprep.mubr.f32.mxu0 0.0
    %1374 = vmatmul.mubr.f32.gmra.mxu0 %v646
    %v1375 = vpop.f32.mrf.mxu0
    %v1376 = vadd.f32 %v1273, %v1375
    %v1377 = vpop.f32.mrf.mxu0
    %1378 = vdwg.mxu0
    %v1379 = vadd.f32 %v675, %v676
    %v1380 = vadd.f32 %v1379, %v677
    %v1381 = vadd.f32 %v1380, %v678
    %v1382 = vadd.f32 %v1381, %v679
    %v1383 = vadd.f32 %v1382, %v680
    %v1384 = vadd.f32 %v1383, %v681
    %v1385 = vadd.f32 %v1384, %v682
    %v1386 = vrot.slane %v1385, 4
    %v1387 = vadd.f32 %v1385, %v1386
    %v1388 = vrot.slane %v1387, 2
    %v1389 = vadd.f32 %v1387, %v1388
    %v1390 = vrot.slane %v1389, 1
    %v1391 = vadd.f32 %v1389, %v1390
    %v1392 = vmul.f32 %v639, %v1391
    %v1393 = vmul.f32 %v640, %v1391
    %v1394 = vmul.f32 %v641, %v1391
    %v1395 = vmul.f32 %v642, %v1391
    %v1396 = vmul.f32 %v643, %v1391
    %v1397 = vmul.f32 %v644, %v1391
    %v1398 = vmul.f32 %v645, %v1391
    %v1399 = vmul.f32 %v646, %v1391
    %1400 = vmatprep.subr.mxu0 0.0
    %1401 = vmatpush1.msra.mxu0 %v975
    %1402 = vmatprep.subr.mxu0 0.0
    %1403 = vmatpush1.msra.mxu0 %v974
    %1404 = vmatprep.subr.mxu0 0.0
    %1405 = vmatpush1.msra.mxu0 %v973
    %1406 = vmatprep.subr.mxu0 0.0
    %1407 = vmatpush1.msra.mxu0 %v972
    %1408 = vmatprep.subr.mxu0 0.0
    %1409 = vmatpush1.msra.mxu0 %v971
    %1410 = vmatprep.subr.mxu0 0.0
    %1411 = vmatpush1.msra.mxu0 %v970
    %1412 = vmatprep.subr.mxu0 0.0
    %1413 = vmatpush1.msra.mxu0 %v969
    %1414 = vmatprep.subr.mxu0 0.0
    %1415 = vmatpush1.msra.mxu0 %v968
    %1416 = vmatprep.subr.mxu0 0.0
    %1417 = vmatpush1.msra.mxu0 %v967
    %1418 = vmatprep.subr.mxu0 0.0
    %1419 = vmatpush1.msra.mxu0 %v966
    %1420 = vmatprep.subr.mxu0 0.0
    %1421 = vmatpush1.msra.mxu0 %v965
    %1422 = vmatprep.subr.mxu0 0.0
    %1423 = vmatpush1.msra.mxu0 %v964
    %1424 = vmatprep.subr.mxu0 0.0
    %1425 = vmatpush1.msra.mxu0 %v963
    %1426 = vmatprep.subr.mxu0 0.0
    %1427 = vmatpush1.msra.mxu0 %v962
    %1428 = vmatprep.subr.mxu0 0.0
    %1429 = vmatpush1.msra.mxu0 %v961
    %1430 = vmatprep.subr.mxu0 0.0
    %1431 = vmatpush1.msra.mxu0 %v960
    %1432 = vmatprep.subr.mxu0 0.0
    %1433 = vmatpush2.msra.mxu0 0.0
    %1434 = vmatprep.subr.mxu0 0.0
    %1435 = vmatpush2.msra.mxu0 0.0
    %1436 = vmatprep.subr.mxu0 0.0
    %1437 = vmatpush2.msra.mxu0 0.0
    %1438 = vmatprep.subr.mxu0 0.0
    %1439 = vmatpush2.msra.mxu0 0.0
    %1440 = vmatprep.subr.mxu0 0.0
    %1441 = vmatpush2.msra.mxu0 0.0
    %1442 = vmatprep.subr.mxu0 0.0
    %1443 = vmatpush2.msra.mxu0 0.0
    %1444 = vmatprep.subr.mxu0 0.0
    %1445 = vmatpush2.msra.mxu0 0.0
    %1446 = vmatprep.subr.mxu0 0.0
    %1447 = vmatpush2.msra.mxu0 0.0
    %1448 = vmatprep.subr.mxu0 0.0
    %1449 = vmatpush2.msra.mxu0 0.0
    %1450 = vmatprep.subr.mxu0 0.0
    %1451 = vmatpush2.msra.mxu0 0.0
    %1452 = vmatprep.subr.mxu0 0.0
    %1453 = vmatpush2.msra.mxu0 0.0
    %1454 = vmatprep.subr.mxu0 0.0
    %1455 = vmatpush2.msra.mxu0 0.0
    %1456 = vmatprep.subr.mxu0 0.0
    %1457 = vmatpush2.msra.mxu0 0.0
    %1458 = vmatprep.subr.mxu0 0.0
    %1459 = vmatpush2.msra.mxu0 0.0
    %1460 = vmatprep.subr.mxu0 0.0
    %1461 = vmatpush2.msra.mxu0 0.0
    %1462 = vmatprep.subr.mxu0 0.0
    %1463 = vmatpush2.msra.mxu0 0.0
    %1464 = vmatprep.mubr.f32.mxu0 0.0
    %1465 = vmatmul.mubr.f32.gmra.mxu0 %v1392
    %v1466 = vpop.f32.mrf.mxu0
    %v1467 = vadd.f32 64.0, %v1466
    %v1468 = vpop.f32.mrf.mxu0
    %1469 = vmatprep.mubr.f32.mxu0 0.0
    %1470 = vmatmul.mubr.f32.gmra.mxu0 %v1393
    %v1471 = vpop.f32.mrf.mxu0
    %v1472 = vadd.f32 64.0, %v1471
    %v1473 = vpop.f32.mrf.mxu0
    %1474 = vmatprep.mubr.f32.mxu0 0.0
    %1475 = vmatmul.mubr.f32.gmra.mxu0 %v1394
    %v1476 = vpop.f32.mrf.mxu0
    %v1477 = vadd.f32 64.0, %v1476
    %v1478 = vpop.f32.mrf.mxu0
    %1479 = vmatprep.mubr.f32.mxu0 0.0
    %1480 = vmatmul.mubr.f32.gmra.mxu0 %v1395
    %v1481 = vpop.f32.mrf.mxu0
    %v1482 = vadd.f32 64.0, %v1481
    %v1483 = vpop.f32.mrf.mxu0
    %1484 = vmatprep.mubr.f32.mxu0 0.0
    %1485 = vmatmul.mubr.f32.gmra.mxu0 %v1396
    %v1486 = vpop.f32.mrf.mxu0
    %v1487 = vadd.f32 64.0, %v1486
    %v1488 = vpop.f32.mrf.mxu0
    %1489 = vmatprep.mubr.f32.mxu0 0.0
    %1490 = vmatmul.mubr.f32.gmra.mxu0 %v1397
    %v1491 = vpop.f32.mrf.mxu0
    %v1492 = vadd.f32 64.0, %v1491
    %v1493 = vpop.f32.mrf.mxu0
    %1494 = vmatprep.mubr.f32.mxu0 0.0
    %1495 = vmatmul.mubr.f32.gmra.mxu0 %v1398
    %v1496 = vpop.f32.mrf.mxu0
    %v1497 = vadd.f32 64.0, %v1496
    %v1498 = vpop.f32.mrf.mxu0
    %1499 = vmatprep.mubr.f32.mxu0 0.0
    %1500 = vmatmul.mubr.f32.gmra.mxu0 %v1399
    %v1501 = vpop.f32.mrf.mxu0
    %v1502 = vadd.f32 64.0, %v1501
    %v1503 = vpop.f32.mrf.mxu0
    %1504 = vdwg.mxu0
    %v1505 = vrcp.pop %v1467
    %v1506 = vmul.f32 %v1341, %v1505
    %v1507 = vrcp.pop %v1472
    %v1508 = vmul.f32 %v1346, %v1507
    %v1509 = vrcp.pop %v1477
    %v1510 = vmul.f32 %v1351, %v1509
    %v1511 = vrcp.pop %v1482
    %v1512 = vmul.f32 %v1356, %v1511
    %v1513 = vrcp.pop %v1487
    %v1514 = vmul.f32 %v1361, %v1513
    %v1515 = vrcp.pop %v1492
    %v1516 = vmul.f32 %v1366, %v1515
    %v1517 = vrcp.pop %v1497
    %v1518 = vmul.f32 %v1371, %v1517
    %v1519 = vrcp.pop %v1502
    %v1520 = vmul.f32 %v1376, %v1519
    %1521 = vmatprep.subr.mxu0 0.0
    %1522 = vmatpush1.msra.mxu0 %v1023
    %1523 = vmatprep.subr.mxu0 0.0
    %1524 = vmatpush1.msra.mxu0 %v1022
    %1525 = vmatprep.subr.mxu0 0.0
    %1526 = vmatpush1.msra.mxu0 %v1021
    %1527 = vmatprep.subr.mxu0 0.0
    %1528 = vmatpush1.msra.mxu0 %v1020
    %1529 = vmatprep.subr.mxu0 0.0
    %1530 = vmatpush1.msra.mxu0 %v1019
    %1531 = vmatprep.subr.mxu0 0.0
    %1532 = vmatpush1.msra.mxu0 %v1018
    %1533 = vmatprep.subr.mxu0 0.0
    %1534 = vmatpush1.msra.mxu0 %v1017
    %1535 = vmatprep.subr.mxu0 0.0
    %1536 = vmatpush1.msra.mxu0 %v1016
    %1537 = vmatprep.subr.mxu0 0.0
    %1538 = vmatpush1.msra.mxu0 %v1015
    %1539 = vmatprep.subr.mxu0 0.0
    %1540 = vmatpush1.msra.mxu0 %v1014
    %1541 = vmatprep.subr.mxu0 0.0
    %1542 = vmatpush1.msra.mxu0 %v1013
    %1543 = vmatprep.subr.mxu0 0.0
    %1544 = vmatpush1.msra.mxu0 %v1012
    %1545 = vmatprep.subr.mxu0 0.0
    %1546 = vmatpush1.msra.mxu0 %v1011
    %1547 = vmatprep.subr.mxu0 0.0
    %1548 = vmatpush1.msra.mxu0 %v1010
    %1549 = vmatprep.subr.mxu0 0.0
    %1550 = vmatpush1.msra.mxu0 %v1009
    %1551 = vmatprep.subr.mxu0 0.0
    %1552 = vmatpush1.msra.mxu0 %v1008
    %1553 = vmatprep.subr.mxu0 0.0
    %1554 = vmatpush2.msra.mxu0 0.0
    %1555 = vmatprep.subr.mxu0 0.0
    %1556 = vmatpush2.msra.mxu0 0.0
    %1557 = vmatprep.subr.mxu0 0.0
    %1558 = vmatpush2.msra.mxu0 0.0
    %1559 = vmatprep.subr.mxu0 0.0
    %1560 = vmatpush2.msra.mxu0 0.0
    %1561 = vmatprep.subr.mxu0 0.0
    %1562 = vmatpush2.msra.mxu0 0.0
    %1563 = vmatprep.subr.mxu0 0.0
    %1564 = vmatpush2.msra.mxu0 0.0
    %1565 = vmatprep.subr.mxu0 0.0
    %1566 = vmatpush2.msra.mxu0 0.0
    %1567 = vmatprep.subr.mxu0 0.0
    %1568 = vmatpush2.msra.mxu0 0.0
    %1569 = vmatprep.subr.mxu0 0.0
    %1570 = vmatpush2.msra.mxu0 0.0
    %1571 = vmatprep.subr.mxu0 0.0
    %1572 = vmatpush2.msra.mxu0 0.0
    %1573 = vmatprep.subr.mxu0 0.0
    %1574 = vmatpush2.msra.mxu0 0.0
    %1575 = vmatprep.subr.mxu0 0.0
    %1576 = vmatpush2.msra.mxu0 0.0
    %1577 = vmatprep.subr.mxu0 0.0
    %1578 = vmatpush2.msra.mxu0 0.0
    %1579 = vmatprep.subr.mxu0 0.0
    %1580 = vmatpush2.msra.mxu0 0.0
    %1581 = vmatprep.subr.mxu0 0.0
    %1582 = vmatpush2.msra.mxu0 0.0
    %1583 = vmatprep.subr.mxu0 0.0
    %1584 = vmatpush2.msra.mxu0 0.0
    %1585 = vmatprep.mubr.f32.mxu0 0.0
    %1586 = vmatmul.mubr.f32.gmra.mxu0 %v1506
    %v1587 = vpop.f32.mrf.mxu0
    %v1588 = vadd.f32 %v313, %v1587
    %v1589 = vpop.f32.mrf.mxu0
    %1590 = vmatprep.mubr.f32.mxu0 0.0
    %1591 = vmatmul.mubr.f32.gmra.mxu0 %v1508
    %v1592 = vpop.f32.mrf.mxu0
    %v1593 = vadd.f32 %v314, %v1592
    %v1594 = vpop.f32.mrf.mxu0
    %1595 = vmatprep.mubr.f32.mxu0 0.0
    %1596 = vmatmul.mubr.f32.gmra.mxu0 %v1510
    %v1597 = vpop.f32.mrf.mxu0
    %v1598 = vadd.f32 %v315, %v1597
    %v1599 = vpop.f32.mrf.mxu0
    %1600 = vmatprep.mubr.f32.mxu0 0.0
    %1601 = vmatmul.mubr.f32.gmra.mxu0 %v1512
    %v1602 = vpop.f32.mrf.mxu0
    %v1603 = vadd.f32 %v316, %v1602
    %v1604 = vpop.f32.mrf.mxu0
    %1605 = vmatprep.mubr.f32.mxu0 0.0
    %1606 = vmatmul.mubr.f32.gmra.mxu0 %v1514
    %v1607 = vpop.f32.mrf.mxu0
    %v1608 = vadd.f32 %v317, %v1607
    %v1609 = vpop.f32.mrf.mxu0
    %1610 = vmatprep.mubr.f32.mxu0 0.0
    %1611 = vmatmul.mubr.f32.gmra.mxu0 %v1516
    %v1612 = vpop.f32.mrf.mxu0
    %v1613 = vadd.f32 %v318, %v1612
    %v1614 = vpop.f32.mrf.mxu0
    %1615 = vmatprep.mubr.f32.mxu0 0.0
    %1616 = vmatmul.mubr.f32.gmra.mxu0 %v1518
    %v1617 = vpop.f32.mrf.mxu0
    %v1618 = vadd.f32 %v319, %v1617
    %v1619 = vpop.f32.mrf.mxu0
    %1620 = vmatprep.mubr.f32.mxu0 0.0
    %1621 = vmatmul.mubr.f32.gmra.mxu0 %v1520
    %v1622 = vpop.f32.mrf.mxu0
    %v1623 = vadd.f32 %v320, %v1622
    %v1624 = vpop.f32.mrf.mxu0
    %1625 = vdwg.mxu0
    %v1626 = vmul.f32 %v1588, 0.5
    %v1627 = vmul.f32 %v1593, 0.5
    %v1628 = vmul.f32 %v1598, 0.5
    %v1629 = vmul.f32 %v1603, 0.5
    %v1630 = vmul.f32 %v1608, 0.5
    %v1631 = vmul.f32 %v1613, 0.5
    %v1632 = vmul.f32 %v1618, 0.5
    %v1633 = vmul.f32 %v1623, 0.5
    %v1634 = vsel %vm183, %v1626, 0.0
    %1635 = vadd.xlane.f32.xlu0 %v1634
    %v1636 = vpop.xlane.xlu0 %1635
    %v1637 = vsel %vm183, %v1627, 0.0
    %1638 = vadd.xlane.f32.xlu0 %v1637
    %v1639 = vpop.xlane.xlu0 %1638
    %v1640 = vsel %vm183, %v1628, 0.0
    %1641 = vadd.xlane.f32.xlu0 %v1640
    %v1642 = vpop.xlane.xlu0 %1641
    %v1643 = vsel %vm183, %v1629, 0.0
    %1644 = vadd.xlane.f32.xlu0 %v1643
    %v1645 = vpop.xlane.xlu0 %1644
    %v1646 = vsel %vm183, %v1630, 0.0
    %1647 = vadd.xlane.f32.xlu0 %v1646
    %v1648 = vpop.xlane.xlu0 %1647
    %v1649 = vsel %vm183, %v1631, 0.0
    %1650 = vadd.xlane.f32.xlu0 %v1649
    %v1651 = vpop.xlane.xlu0 %1650
    %v1652 = vsel %vm183, %v1632, 0.0
    %1653 = vadd.xlane.f32.xlu0 %v1652
    %v1654 = vpop.xlane.xlu0 %1653
    %v1655 = vsel %vm183, %v1633, 0.0
    %1656 = vadd.xlane.f32.xlu0 %v1655
    %v1657 = vpop.xlane.xlu0 %1656
    %v1658 = vmul.f32 %v1636, %v208
    %v1659 = vmul.f32 %v1639, %v208
    %v1660 = vmul.f32 %v1642, %v208
    %v1661 = vmul.f32 %v1645, %v208
    %v1662 = vmul.f32 %v1648, %v208
    %v1663 = vmul.f32 %v1651, %v208
    %v1664 = vmul.f32 %v1654, %v208
    %v1665 = vmul.f32 %v1657, %v208
    %v1666 = vsub.f32 %v1626, %v1658
    %v1667 = vsub.f32 %v1627, %v1659
    %v1668 = vsub.f32 %v1628, %v1660
    %v1669 = vsub.f32 %v1629, %v1661
    %v1670 = vsub.f32 %v1630, %v1662
    %v1671 = vsub.f32 %v1631, %v1663
    %v1672 = vsub.f32 %v1632, %v1664
    %v1673 = vsub.f32 %v1633, %v1665
    %v1674 = vmul.f32 %v1666, %v1666
    %v1675 = vmul.f32 %v1667, %v1667
    %v1676 = vmul.f32 %v1668, %v1668
    %v1677 = vmul.f32 %v1669, %v1669
    %v1678 = vmul.f32 %v1670, %v1670
    %v1679 = vmul.f32 %v1671, %v1671
    %v1680 = vmul.f32 %v1672, %v1672
    %v1681 = vmul.f32 %v1673, %v1673
    %v1682 = vsel %vm183, %v1674, 0.0
    %1683 = vadd.xlane.f32.xlu0 %v1682
    %v1684 = vpop.xlane.xlu0 %1683
    %v1685 = vsel %vm183, %v1675, 0.0
    %1686 = vadd.xlane.f32.xlu0 %v1685
    %v1687 = vpop.xlane.xlu0 %1686
    %v1688 = vsel %vm183, %v1676, 0.0
    %1689 = vadd.xlane.f32.xlu0 %v1688
    %v1690 = vpop.xlane.xlu0 %1689
    %v1691 = vsel %vm183, %v1677, 0.0
    %1692 = vadd.xlane.f32.xlu0 %v1691
    %v1693 = vpop.xlane.xlu0 %1692
    %v1694 = vsel %vm183, %v1678, 0.0
    %1695 = vadd.xlane.f32.xlu0 %v1694
    %v1696 = vpop.xlane.xlu0 %1695
    %v1697 = vsel %vm183, %v1679, 0.0
    %1698 = vadd.xlane.f32.xlu0 %v1697
    %v1699 = vpop.xlane.xlu0 %1698
    %v1700 = vsel %vm183, %v1680, 0.0
    %1701 = vadd.xlane.f32.xlu0 %v1700
    %v1702 = vpop.xlane.xlu0 %1701
    %v1703 = vsel %vm183, %v1681, 0.0
    %1704 = vadd.xlane.f32.xlu0 %v1703
    %v1705 = vpop.xlane.xlu0 %1704
    %v1706 = vmul.f32 %v1684, %v208
    %v1707 = vmul.f32 %v1687, %v208
    %v1708 = vmul.f32 %v1690, %v208
    %v1709 = vmul.f32 %v1693, %v208
    %v1710 = vmul.f32 %v1696, %v208
    %v1711 = vmul.f32 %v1699, %v208
    %v1712 = vmul.f32 %v1702, %v208
    %v1713 = vmul.f32 %v1705, %v208
    %v1714 = vadd.f32 %v1706, 1e-05
    %v1715 = vadd.f32 %v1707, 1e-05
    %v1716 = vadd.f32 %v1708, 1e-05
    %v1717 = vadd.f32 %v1709, 1e-05
    %v1718 = vadd.f32 %v1710, 1e-05
    %v1719 = vadd.f32 %v1711, 1e-05
    %v1720 = vadd.f32 %v1712, 1e-05
    %v1721 = vadd.f32 %v1713, 1e-05
    %v1722 = vrsqrt.pop %v1714
    %v1723 = vrsqrt.pop %v1715
    %v1724 = vrsqrt.pop %v1716
    %v1725 = vrsqrt.pop %v1717
    %v1726 = vrsqrt.pop %v1718
    %v1727 = vrsqrt.pop %v1719
    %v1728 = vrsqrt.pop %v1720
    %v1729 = vrsqrt.pop %v1721
    %v1730 = vmul.f32 %v1666, %v1722
    %v1731 = vmul.f32 %v1667, %v1723
    %v1732 = vmul.f32 %v1668, %v1724
    %v1733 = vmul.f32 %v1669, %v1725
    %v1734 = vmul.f32 %v1670, %v1726
    %v1735 = vmul.f32 %v1671, %v1727
    %v1736 = vmul.f32 %v1672, %v1728
    %v1737 = vmul.f32 %v1673, %v1729
    %v1738 = vlaneseq
    %v1739 = vshrl.u32 %v1738, 7
    %v1740 = vsub.s32 0, %v1739
    %v1741 = vrot.slane %v34, %v1740
    %v1742 = vmul.f32 %v1730, %v1741
    %v1743 = vmul.f32 %v1731, %v1741
    %v1744 = vmul.f32 %v1732, %v1741
    %v1745 = vmul.f32 %v1733, %v1741
    %v1746 = vmul.f32 %v1734, %v1741
    %v1747 = vmul.f32 %v1735, %v1741
    %v1748 = vmul.f32 %v1736, %v1741
    %v1749 = vmul.f32 %v1737, %v1741
    %v1750 = vlaneseq
    %v1751 = vshrl.u32 %v1750, 7
    %v1752 = vsub.s32 0, %v1751
    %v1753 = vrot.slane %v35, %v1752
    %v1754 = vadd.f32 %v1742, %v1753
    %v1755 = vadd.f32 %v1743, %v1753
    %v1756 = vadd.f32 %v1744, %v1753
    %v1757 = vadd.f32 %v1745, %v1753
    %v1758 = vadd.f32 %v1746, %v1753
    %v1759 = vadd.f32 %v1747, %v1753
    %v1760 = vadd.f32 %v1748, %v1753
    %v1761 = vadd.f32 %v1749, %v1753
    %v1762 = vmax.f32 %v1754, 0.0
    %v1763 = vmax.f32 %v1755, 0.0
    %v1764 = vmax.f32 %v1756, 0.0
    %v1765 = vmax.f32 %v1757, 0.0
    %v1766 = vmax.f32 %v1758, 0.0
    %v1767 = vmax.f32 %v1759, 0.0
    %v1768 = vmax.f32 %v1760, 0.0
    %v1769 = vmax.f32 %v1761, 0.0
    %1770 = vst.msk [vmem:[%s4] sm:$0xff] %vm183, %v1762
    %1771 = vst.msk [vmem:[%s4 + $0x8] sm:$0xff] %vm183, %v1763
    %1772 = vst.msk [vmem:[%s4 + $0x10] sm:$0xff] %vm183, %v1764
    %1773 = vst.msk [vmem:[%s4 + $0x18] sm:$0xff] %vm183, %v1765
    %1774 = vst.msk [vmem:[%s4 + $0x20] sm:$0xff] %vm183, %v1766
    %1775 = vst.msk [vmem:[%s4 + $0x28] sm:$0xff] %vm183, %v1767
    %1776 = vst.msk [vmem:[%s4 + $0x30] sm:$0xff] %vm183, %v1768
    %1777 = vst.msk [vmem:[%s4 + $0x38] sm:$0xff] %vm183, %v1769
    // Predicated region
    $region22: #{tpu_custom_call.1} parent=1 // pred_check
      _
    $region23: #{tpu_custom_call.1} parent=1 // pred_check_branch
      %1779 = sbr.rel (0) target = $region25
    $region24: #{tpu_custom_call.1} parent=1 // pred_region
      _
    $region25: #{tpu_custom_call.1} parent=1 // pred_fallthru
      _
    // Predicated region
    $region26: #{tpu_custom_call.1} parent=1 // pred_check
      _
    $region27: #{tpu_custom_call.1} parent=1 // pred_check_branch
      %1781 = sbr.rel (0) target = $region29
    $region28: #{tpu_custom_call.1} parent=1 // pred_region
      _
    $region29: #{tpu_custom_call.1} parent=1 // pred_fallthru
      _
    %1782 = vsyncpa [#allocation3], 1

</llo_original>
